<compile_context>
chip_gen: v5e
topology: v5e:2x2
jax: 0.10.0
libtpu: 0.0.40
codegen_flags: <defaults>
</compile_context>

<pallas_src>
import jax
import jax.numpy as jnp
from jax import lax
from jax.experimental import pallas as pl
from jax.experimental.pallas import tpu as pltpu


def lstm_fc_kernel(x_ref, h0_ref, c0_ref, wih_ref, whh_ref, b_ref,
                   fcw_ref, fcb_ref,
                   out_ref, hN_ref, cN_ref,
                   g_scr, h_scr):
    """x_ref: (T*Bp, H); wih/whh: (L, H, 4H); b: (L, 1, 4H);
    fcw: (H, Op) lane-dense; out_ref: (T*Bp, Op);
    g_scr: (T*Bp, 4H) f32 bulk gates; h_scr: (T*Bp, H) per-step layer output."""
    TB, H = x_ref.shape
    L, Bp, _ = h0_ref.shape
    T = TB // Bp
    cdtype = x_ref.dtype

    def gate_update(gates, c_prev):
        # Whole-vreg activations over all 4H = 128 gate lanes (2 EUP passes),
        # then per-gate slices; cell math stays f32.
        sig = jax.nn.sigmoid(gates)
        tnh = jnp.tanh(gates)
        i_g = sig[:, 0 * H:1 * H]
        f_g = sig[:, 1 * H:2 * H]
        g_g = tnh[:, 2 * H:3 * H]
        o_g = sig[:, 3 * H:4 * H]
        c_new = f_g * c_prev + i_g * g_g
        h_new = o_g * jnp.tanh(c_new)
        return h_new, c_new

    def run_layer(l, layer_in_ref):
        # (1) bulk input-to-hidden gates for ALL timesteps: one well-shaped
        #     (T*Bp, H) @ (H, 4H) MXU push instead of T tiny per-step pushes.
        #     This read fully consumes the previous layer's h BEFORE the
        #     recurrence below overwrites h_scr in place.
        g_scr[...] = (jnp.dot(layer_in_ref[...], wih_ref[l],
                              preferred_element_type=jnp.float32)
                      + b_ref[l])

        whh_l = whh_ref[l]  # hoisted loop-invariant (fine at H=32; see TODO)

        # (2) recurrence: only h_prev @ W_hh stays on the serial chain.
        def step(t, carry):
            h_prev, c_prev = carry
            off = pl.multiple_of(t * Bp, 8)
            gates = g_scr[pl.ds(off, Bp), :] + jnp.dot(
                h_prev.astype(cdtype), whh_l,
                preferred_element_type=jnp.float32)
            h_new, c_new = gate_update(gates, c_prev)
            h_scr[pl.ds(off, Bp), :] = h_new.astype(cdtype)
            return h_new, c_new

        h_last, c_last = lax.fori_loop(0, T, step,
                                       (h0_ref[l], c0_ref[l]), unroll=True)
        hN_ref[l] = h_last
        cN_ref[l] = c_last

    # layer 0 reads the embedded input; layers >= 1 read the previous layer's
    # per-step h from h_scr (bulk-consumed before being overwritten).
    run_layer(0, x_ref)
    for l in range(1, L):
        run_layer(l, h_scr)

    # (3) hoisted lane-dense FC: one (T*Bp, H) @ (H, Op) matmul + bias,
    #     unmasked full-lane store (Op is a multiple of 128).
    out_ref[...] = (jnp.dot(h_scr[...], fcw_ref[...],
                            preferred_element_type=jnp.float32)
                    + fcb_ref[...])


def char_lstm_forward(params, x_tokens, hidden_state, *,
                      compute_dtype=jnp.bfloat16):
    """Mirrors CharLSTM.forward: returns (out[B*T, O], (h_n, c_n))."""
    emb_tbl = params["embedding"]                 # (V, H)
    # TODO(synk): fuse this gather into the kernel at scale (scalar-prefetched
    # ids + VMEM-resident table) to avoid an extra HBM round trip of (B,T,H).
    x_emb = jnp.take(emb_tbl, x_tokens, axis=0)   # (B, T, H)
    B, T, H = x_emb.shape

    h0, c0 = hidden_state                         # (L, B, H) each
    L = h0.shape[0]
    O = params["fc_w"].shape[1]

    # pad batch up to a multiple of 8 sublanes (padded rows are independent)
    Bp = max(8, -(-B // 8) * 8)
    pad = Bp - B
    x_tbh = jnp.transpose(x_emb, (1, 0, 2)).astype(compute_dtype)  # (T, B, H)
    if pad:
        x_tbh = jnp.pad(x_tbh, ((0, 0), (0, pad), (0, 0)))
        h0 = jnp.pad(h0, ((0, 0), (0, pad), (0, 0)))
        c0 = jnp.pad(c0, ((0, 0), (0, pad), (0, 0)))
    x_flat = x_tbh.reshape(T * Bp, H)             # time-major, pre-flattened

    # lane-dense FC output: pad O up to a multiple of 128 lanes with ZERO
    # weights and ZERO bias (padded columns stay exactly zero, sliced off).
    Op = max(128, -(-O // 128) * 128)
    fc_w = jnp.zeros((H, Op), compute_dtype).at[:, :O].set(
        params["fc_w"].astype(compute_dtype))
    fc_b = jnp.zeros((1, Op), jnp.float32).at[:, :O].set(params["fc_b"])

    w_ih = params["w_ih"].astype(compute_dtype)
    w_hh = params["w_hh"].astype(compute_dtype)

    vmem = pl.BlockSpec(memory_space=pltpu.MemorySpace.VMEM)

    out_flat, hN, cN = pl.pallas_call(
        lstm_fc_kernel,
        out_shape=(
            jax.ShapeDtypeStruct((T * Bp, Op), jnp.float32),
            jax.ShapeDtypeStruct((L, Bp, H), jnp.float32),
            jax.ShapeDtypeStruct((L, Bp, H), jnp.float32),
        ),
        in_specs=[vmem] * 8,
        out_specs=(vmem, vmem, vmem),
        scratch_shapes=[
            pltpu.VMEM((T * Bp, 4 * H), jnp.float32),   # bulk per-layer gates
            pltpu.VMEM((T * Bp, H), compute_dtype),     # per-step layer h
        ],
        compiler_params=pltpu.CompilerParams(
            vmem_limit_bytes=32 * 1024 * 1024),         # explicit, v5e/v7x-safe
    )(x_flat, h0, c0, w_ih, w_hh, params["b"], fc_w, fc_b)

    # PyTorch batch_first reshape => row index b*T + t
    out = out_flat.reshape(T, Bp, Op)[:, :B, :O]
    out = jnp.transpose(out, (1, 0, 2)).reshape(B * T, O)
    return out, (hN[:, :B, :], cN[:, :B, :])


def ref_forward(params, x_tokens, hidden_state):
    """Pure-JAX reference matching PyTorch nn.LSTM semantics (for checking)."""
    emb = jnp.take(params["embedding"], x_tokens, axis=0)  # (B, T, H)
    B, T, H = emb.shape
    L = params["w_ih"].shape[0]
    hs = [hidden_state[0][l] for l in range(L)]
    cs = [hidden_state[1][l] for l in range(L)]
    outs = []
    for t in range(T):
        inp = emb[:, t, :]
        for l in range(L):
            gates = (inp @ params["w_ih"][l]
                     + hs[l] @ params["w_hh"][l]
                     + params["b"][l])
            i_g = jax.nn.sigmoid(gates[:, 0 * H:1 * H])
            f_g = jax.nn.sigmoid(gates[:, 1 * H:2 * H])
            g_g = jnp.tanh(gates[:, 2 * H:3 * H])
            o_g = jax.nn.sigmoid(gates[:, 3 * H:4 * H])
            cs[l] = f_g * cs[l] + i_g * g_g
            hs[l] = o_g * jnp.tanh(cs[l])
            inp = hs[l]
        outs.append(inp)
    out_bth = jnp.stack(outs, axis=1)                       # (B, T, H)
    out = out_bth.reshape(B * T, H) @ params["fc_w"] + params["fc_b"]
    return out, (jnp.stack(hs), jnp.stack(cs))


def init_params(key, vocab_size, hidden_dim, output_dim, num_layers):
    """Deterministic synthetic params, PyTorch-style init ranges."""
    H, V, O, L = hidden_dim, vocab_size, output_dim, num_layers
    k = 1.0 / jnp.sqrt(jnp.float32(H))
    ks = jax.random.split(key, 6)
    return {
        # nn.Embedding: N(0, 1)
        "embedding": jax.random.normal(ks[0], (V, H), jnp.float32),
        # nn.LSTM weights: U(-1/sqrt(H), 1/sqrt(H)); stored transposed (in, 4H)
        "w_ih": jax.random.uniform(ks[1], (L, H, 4 * H), jnp.float32, -k, k),
        "w_hh": jax.random.uniform(ks[2], (L, H, 4 * H), jnp.float32, -k, k),
        # combined bias b_ih + b_hh
        "b": jax.random.uniform(ks[3], (L, 1, 4 * H), jnp.float32, -k, k),
        # nn.Linear(H, O): stored transposed (H, O)
        "fc_w": jax.random.uniform(ks[4], (H, O), jnp.float32, -k, k),
        "fc_b": jax.random.uniform(ks[5], (1, O), jnp.float32, -k, k),
    }


if __name__ == "__main__":
    vocab_size, hidden_dim, output_dim, num_layers = 16, 32, 16, 2
    batch, seq = 2, 8

    root = jax.random.PRNGKey(0)
    k_params, k_tokens = jax.random.split(root)

    params = init_params(k_params, vocab_size, hidden_dim, output_dim, num_layers)
    x = jax.random.randint(k_tokens, (batch, seq), 0, vocab_size, dtype=jnp.int32)

    # init_hidden(batch): zeros of shape (num_layers, B, H)
    h0 = jnp.zeros((num_layers, batch, hidden_dim), jnp.float32)
    c0 = jnp.zeros((num_layers, batch, hidden_dim), jnp.float32)

    out_r, (h_r, c_r) = ref_forward(params, x, (h0, c0))

    # f32 matmul path (exact check against the pure-JAX reference)
    out, (hN, cN) = char_lstm_forward(params, x, (h0, c0),
                                      compute_dtype=jnp.float32)
    jax.block_until_ready((out, hN, cN))
    assert out.shape == (batch * seq, output_dim)
    assert hN.shape == (num_layers, batch, hidden_dim)
    assert jnp.allclose(out, out_r, atol=1e-3, rtol=1e-3)
    assert jnp.allclose(hN, h_r, atol=1e-3, rtol=1e-3)
    assert jnp.allclose(cN, c_r, atol=1e-3, rtol=1e-3)

    # default bf16 MXU-operand path (v5e/v6e/v7x); gate/cell math stays f32.
    # Note: bf16 rounding on the recurrent operand accumulates over long T.
    out_bf, (hN_bf, cN_bf) = char_lstm_forward(params, x, (h0, c0))
    jax.block_until_ready((out_bf, hN_bf, cN_bf))
    assert jnp.allclose(out_bf, out_r, atol=5e-2, rtol=5e-2)
    assert jnp.allclose(hN_bf, h_r, atol=5e-2, rtol=5e-2)
    assert jnp.allclose(cN_bf, c_r, atol=5e-2, rtol=5e-2)

    print("KERNEL_OK")
</pallas_src>

<mosaic_0001>
module attributes {stable_mosaic.version = 11 : i64} {
  func.func @lstm_fc_kernel(%arg0: memref<64x32xf32, #tpu.memory_space<vmem>>, %arg1: memref<2x8x32xf32, #tpu.memory_space<vmem>>, %arg2: memref<2x8x32xf32, #tpu.memory_space<vmem>>, %arg3: memref<2x32x128xf32, #tpu.memory_space<vmem>>, %arg4: memref<2x32x128xf32, #tpu.memory_space<vmem>>, %arg5: memref<2x1x128xf32, #tpu.memory_space<vmem>>, %arg6: memref<32x128xf32, #tpu.memory_space<vmem>>, %arg7: memref<1x128xf32, #tpu.memory_space<vmem>>, %arg8: memref<64x128xf32, #tpu.memory_space<vmem>>, %arg9: memref<2x8x32xf32, #tpu.memory_space<vmem>>, %arg10: memref<2x8x32xf32, #tpu.memory_space<vmem>>, %arg11: memref<64x128xf32, #tpu.memory_space<vmem>>, %arg12: memref<64x32xf32, #tpu.memory_space<vmem>>) attributes {dimension_semantics = [], scalar_prefetch = 0 : i64, scratch_operands = 2 : i64, tpu.core_type = #tpu.core_type<tc>} {
    %c0 = arith.constant 0 : index
    %c0_0 = arith.constant 0 : index
    %0 = vector.load %arg0[%c0, %c0_0] : memref<64x32xf32, #tpu.memory_space<vmem>>, vector<64x32xf32>
    %c0_1 = arith.constant 0 : index
    %c0_2 = arith.constant 0 : index
    %c0_3 = arith.constant 0 : index
    %1 = vector.load %arg3[%c0_1, %c0_2, %c0_3] : memref<2x32x128xf32, #tpu.memory_space<vmem>>, vector<1x32x128xf32>
    %2 = vector.shape_cast %1 : vector<1x32x128xf32> to vector<32x128xf32>
    %cst = arith.constant dense<0.000000e+00> : vector<64x128xf32>
    %3 = tpu.matmul %0, %2, %cst {dimension_numbers = #tpu.dot_dimension_numbers<[1], [0], [0], [1], [0, 0, 1, 1], [], []>} : vector<64x32xf32>, vector<32x128xf32>, vector<64x128xf32> -> vector<64x128xf32>
    %c0_4 = arith.constant 0 : index
    %c0_5 = arith.constant 0 : index
    %c0_6 = arith.constant 0 : index
    %4 = vector.load %arg5[%c0_4, %c0_5, %c0_6] : memref<2x1x128xf32, #tpu.memory_space<vmem>>, vector<1x1x128xf32>
    %5 = vector.shape_cast %4 : vector<1x1x128xf32> to vector<1x128xf32>
    %6 = vector.broadcast %5 : vector<1x128xf32> to vector<64x128xf32>
    %7 = arith.addf %3, %6 : vector<64x128xf32>
    %c0_7 = arith.constant 0 : index
    %c0_8 = arith.constant 0 : index
    %8 = vector.load %arg11[%c0_7, %c0_8] : memref<64x128xf32, #tpu.memory_space<vmem>>, vector<64x128xf32>
    tpu.vector_store %arg11[%c0_7, %c0_8], %7 {strides = array<i32>} : memref<64x128xf32, #tpu.memory_space<vmem>>, vector<64x128xf32>,
    %c0_9 = arith.constant 0 : index
    %c0_10 = arith.constant 0 : index
    %c0_11 = arith.constant 0 : index
    %9 = vector.load %arg4[%c0_9, %c0_10, %c0_11] : memref<2x32x128xf32, #tpu.memory_space<vmem>>, vector<1x32x128xf32>
    %10 = vector.shape_cast %9 : vector<1x32x128xf32> to vector<32x128xf32>
    %c0_12 = arith.constant 0 : index
    %c0_13 = arith.constant 0 : index
    %c0_14 = arith.constant 0 : index
    %11 = vector.load %arg1[%c0_12, %c0_13, %c0_14] : memref<2x8x32xf32, #tpu.memory_space<vmem>>, vector<1x8x32xf32>
    %12 = vector.shape_cast %11 : vector<1x8x32xf32> to vector<8x32xf32>
    %c0_15 = arith.constant 0 : index
    %c0_16 = arith.constant 0 : index
    %c0_17 = arith.constant 0 : index
    %13 = vector.load %arg2[%c0_15, %c0_16, %c0_17] : memref<2x8x32xf32, #tpu.memory_space<vmem>>, vector<1x8x32xf32>
    %14 = vector.shape_cast %13 : vector<1x8x32xf32> to vector<8x32xf32>
    %c0_i32 = arith.constant 0 : i32
    %c8_i32 = arith.constant 8 : i32
    %15 = arith.muli %c0_i32, %c8_i32 : i32
    %16 = tpu.assume_multiple %15, 8 : i32
    %17 = arith.index_cast %16 : i32 to index
    %c0_18 = arith.constant 0 : index
    %18 = vector.load %arg11[%17, %c0_18] : memref<64x128xf32, #tpu.memory_space<vmem>>, vector<8x128xf32>
    %cst_19 = arith.constant dense<0.000000e+00> : vector<8x128xf32>
    %19 = tpu.matmul %12, %10, %cst_19 {dimension_numbers = #tpu.dot_dimension_numbers<[1], [0], [0], [1], [0, 0, 1, 1], [], []>} : vector<8x32xf32>, vector<32x128xf32>, vector<8x128xf32> -> vector<8x128xf32>
    %20 = arith.addf %18, %19 : vector<8x128xf32>
    %21 = arith.negf %20 : vector<8x128xf32>
    %22 = math.exp %21 : vector<8x128xf32>
    %cst_20 = arith.constant 1.000000e+00 : f32
    %23 = vector.broadcast %cst_20 : f32 to vector<8x128xf32>
    %24 = arith.addf %23, %22 : vector<8x128xf32>
    %25 = arith.divf %23, %24 : vector<8x128xf32>
    %26 = math.tanh %20 : vector<8x128xf32>
    %27 = vector.extract_strided_slice %25 {offsets = [0, 0], sizes = [8, 32], strides = [1, 1]} : vector<8x128xf32> to vector<8x32xf32>
    %28 = vector.extract_strided_slice %25 {offsets = [0, 32], sizes = [8, 32], strides = [1, 1]} : vector<8x128xf32> to vector<8x32xf32>
    %29 = vector.extract_strided_slice %26 {offsets = [0, 64], sizes = [8, 32], strides = [1, 1]} : vector<8x128xf32> to vector<8x32xf32>
    %30 = vector.extract_strided_slice %25 {offsets = [0, 96], sizes = [8, 32], strides = [1, 1]} : vector<8x128xf32> to vector<8x32xf32>
    %31 = arith.mulf %28, %14 : vector<8x32xf32>
    %32 = arith.mulf %27, %29 : vector<8x32xf32>
    %33 = arith.addf %31, %32 : vector<8x32xf32>
    %34 = math.tanh %33 : vector<8x32xf32>
    %35 = arith.mulf %30, %34 : vector<8x32xf32>
    %36 = arith.index_cast %16 : i32 to index
    %c0_21 = arith.constant 0 : index
    %37 = vector.load %arg12[%36, %c0_21] : memref<64x32xf32, #tpu.memory_space<vmem>>, vector<8x32xf32>
    tpu.vector_store %arg12[%36, %c0_21], %35 {strides = array<i32>} : memref<64x32xf32, #tpu.memory_space<vmem>>, vector<8x32xf32>,
    %c1_i32 = arith.constant 1 : i32
    %c8_i32_22 = arith.constant 8 : i32
    %38 = arith.muli %c1_i32, %c8_i32_22 : i32
    %39 = tpu.assume_multiple %38, 8 : i32
    %40 = arith.index_cast %39 : i32 to index
    %c0_23 = arith.constant 0 : index
    %41 = vector.load %arg11[%40, %c0_23] : memref<64x128xf32, #tpu.memory_space<vmem>>, vector<8x128xf32>
    %cst_24 = arith.constant dense<0.000000e+00> : vector<8x128xf32>
    %42 = tpu.matmul %35, %10, %cst_24 {dimension_numbers = #tpu.dot_dimension_numbers<[1], [0], [0], [1], [0, 0, 1, 1], [], []>} : vector<8x32xf32>, vector<32x128xf32>, vector<8x128xf32> -> vector<8x128xf32>
    %43 = arith.addf %41, %42 : vector<8x128xf32>
    %44 = arith.negf %43 : vector<8x128xf32>
    %45 = math.exp %44 : vector<8x128xf32>
    %cst_25 = arith.constant 1.000000e+00 : f32
    %46 = vector.broadcast %cst_25 : f32 to vector<8x128xf32>
    %47 = arith.addf %46, %45 : vector<8x128xf32>
    %48 = arith.divf %46, %47 : vector<8x128xf32>
    %49 = math.tanh %43 : vector<8x128xf32>
    %50 = vector.extract_strided_slice %48 {offsets = [0, 0], sizes = [8, 32], strides = [1, 1]} : vector<8x128xf32> to vector<8x32xf32>
    %51 = vector.extract_strided_slice %48 {offsets = [0, 32], sizes = [8, 32], strides = [1, 1]} : vector<8x128xf32> to vector<8x32xf32>
    %52 = vector.extract_strided_slice %49 {offsets = [0, 64], sizes = [8, 32], strides = [1, 1]} : vector<8x128xf32> to vector<8x32xf32>
    %53 = vector.extract_strided_slice %48 {offsets = [0, 96], sizes = [8, 32], strides = [1, 1]} : vector<8x128xf32> to vector<8x32xf32>
    %54 = arith.mulf %51, %33 : vector<8x32xf32>
    %55 = arith.mulf %50, %52 : vector<8x32xf32>
    %56 = arith.addf %54, %55 : vector<8x32xf32>
    %57 = math.tanh %56 : vector<8x32xf32>
    %58 = arith.mulf %53, %57 : vector<8x32xf32>
    %59 = arith.index_cast %39 : i32 to index
    %c0_26 = arith.constant 0 : index
    %60 = vector.load %arg12[%59, %c0_26] : memref<64x32xf32, #tpu.memory_space<vmem>>, vector<8x32xf32>
    tpu.vector_store %arg12[%59, %c0_26], %58 {strides = array<i32>} : memref<64x32xf32, #tpu.memory_space<vmem>>, vector<8x32xf32>,
    %c2_i32 = arith.constant 2 : i32
    %c8_i32_27 = arith.constant 8 : i32
    %61 = arith.muli %c2_i32, %c8_i32_27 : i32
    %62 = tpu.assume_multiple %61, 8 : i32
    %63 = arith.index_cast %62 : i32 to index
    %c0_28 = arith.constant 0 : index
    %64 = vector.load %arg11[%63, %c0_28] : memref<64x128xf32, #tpu.memory_space<vmem>>, vector<8x128xf32>
    %cst_29 = arith.constant dense<0.000000e+00> : vector<8x128xf32>
    %65 = tpu.matmul %58, %10, %cst_29 {dimension_numbers = #tpu.dot_dimension_numbers<[1], [0], [0], [1], [0, 0, 1, 1], [], []>} : vector<8x32xf32>, vector<32x128xf32>, vector<8x128xf32> -> vector<8x128xf32>
    %66 = arith.addf %64, %65 : vector<8x128xf32>
    %67 = arith.negf %66 : vector<8x128xf32>
    %68 = math.exp %67 : vector<8x128xf32>
    %cst_30 = arith.constant 1.000000e+00 : f32
    %69 = vector.broadcast %cst_30 : f32 to vector<8x128xf32>
    %70 = arith.addf %69, %68 : vector<8x128xf32>
    %71 = arith.divf %69, %70 : vector<8x128xf32>
    %72 = math.tanh %66 : vector<8x128xf32>
    %73 = vector.extract_strided_slice %71 {offsets = [0, 0], sizes = [8, 32], strides = [1, 1]} : vector<8x128xf32> to vector<8x32xf32>
    %74 = vector.extract_strided_slice %71 {offsets = [0, 32], sizes = [8, 32], strides = [1, 1]} : vector<8x128xf32> to vector<8x32xf32>
    %75 = vector.extract_strided_slice %72 {offsets = [0, 64], sizes = [8, 32], strides = [1, 1]} : vector<8x128xf32> to vector<8x32xf32>
    %76 = vector.extract_strided_slice %71 {offsets = [0, 96], sizes = [8, 32], strides = [1, 1]} : vector<8x128xf32> to vector<8x32xf32>
    %77 = arith.mulf %74, %56 : vector<8x32xf32>
    %78 = arith.mulf %73, %75 : vector<8x32xf32>
    %79 = arith.addf %77, %78 : vector<8x32xf32>
    %80 = math.tanh %79 : vector<8x32xf32>
    %81 = arith.mulf %76, %80 : vector<8x32xf32>
    %82 = arith.index_cast %62 : i32 to index
    %c0_31 = arith.constant 0 : index
    %83 = vector.load %arg12[%82, %c0_31] : memref<64x32xf32, #tpu.memory_space<vmem>>, vector<8x32xf32>
    tpu.vector_store %arg12[%82, %c0_31], %81 {strides = array<i32>} : memref<64x32xf32, #tpu.memory_space<vmem>>, vector<8x32xf32>,
    %c3_i32 = arith.constant 3 : i32
    %c8_i32_32 = arith.constant 8 : i32
    %84 = arith.muli %c3_i32, %c8_i32_32 : i32
    %85 = tpu.assume_multiple %84, 8 : i32
    %86 = arith.index_cast %85 : i32 to index
    %c0_33 = arith.constant 0 : index
    %87 = vector.load %arg11[%86, %c0_33] : memref<64x128xf32, #tpu.memory_space<vmem>>, vector<8x128xf32>
    %cst_34 = arith.constant dense<0.000000e+00> : vector<8x128xf32>
    %88 = tpu.matmul %81, %10, %cst_34 {dimension_numbers = #tpu.dot_dimension_numbers<[1], [0], [0], [1], [0, 0, 1, 1], [], []>} : vector<8x32xf32>, vector<32x128xf32>, vector<8x128xf32> -> vector<8x128xf32>
    %89 = arith.addf %87, %88 : vector<8x128xf32>
    %90 = arith.negf %89 : vector<8x128xf32>
    %91 = math.exp %90 : vector<8x128xf32>
    %cst_35 = arith.constant 1.000000e+00 : f32
    %92 = vector.broadcast %cst_35 : f32 to vector<8x128xf32>
    %93 = arith.addf %92, %91 : vector<8x128xf32>
    %94 = arith.divf %92, %93 : vector<8x128xf32>
    %95 = math.tanh %89 : vector<8x128xf32>
    %96 = vector.extract_strided_slice %94 {offsets = [0, 0], sizes = [8, 32], strides = [1, 1]} : vector<8x128xf32> to vector<8x32xf32>
    %97 = vector.extract_strided_slice %94 {offsets = [0, 32], sizes = [8, 32], strides = [1, 1]} : vector<8x128xf32> to vector<8x32xf32>
    %98 = vector.extract_strided_slice %95 {offsets = [0, 64], sizes = [8, 32], strides = [1, 1]} : vector<8x128xf32> to vector<8x32xf32>
    %99 = vector.extract_strided_slice %94 {offsets = [0, 96], sizes = [8, 32], strides = [1, 1]} : vector<8x128xf32> to vector<8x32xf32>
    %100 = arith.mulf %97, %79 : vector<8x32xf32>
    %101 = arith.mulf %96, %98 : vector<8x32xf32>
    %102 = arith.addf %100, %101 : vector<8x32xf32>
    %103 = math.tanh %102 : vector<8x32xf32>
    %104 = arith.mulf %99, %103 : vector<8x32xf32>
    %105 = arith.index_cast %85 : i32 to index
    %c0_36 = arith.constant 0 : index
    %106 = vector.load %arg12[%105, %c0_36] : memref<64x32xf32, #tpu.memory_space<vmem>>, vector<8x32xf32>
    tpu.vector_store %arg12[%105, %c0_36], %104 {strides = array<i32>} : memref<64x32xf32, #tpu.memory_space<vmem>>, vector<8x32xf32>,
    %c4_i32 = arith.constant 4 : i32
    %c8_i32_37 = arith.constant 8 : i32
    %107 = arith.muli %c4_i32, %c8_i32_37 : i32
    %108 = tpu.assume_multiple %107, 8 : i32
    %109 = arith.index_cast %108 : i32 to index
    %c0_38 = arith.constant 0 : index
    %110 = vector.load %arg11[%109, %c0_38] : memref<64x128xf32, #tpu.memory_space<vmem>>, vector<8x128xf32>
    %cst_39 = arith.constant dense<0.000000e+00> : vector<8x128xf32>
    %111 = tpu.matmul %104, %10, %cst_39 {dimension_numbers = #tpu.dot_dimension_numbers<[1], [0], [0], [1], [0, 0, 1, 1], [], []>} : vector<8x32xf32>, vector<32x128xf32>, vector<8x128xf32> -> vector<8x128xf32>
    %112 = arith.addf %110, %111 : vector<8x128xf32>
    %113 = arith.negf %112 : vector<8x128xf32>
    %114 = math.exp %113 : vector<8x128xf32>
    %cst_40 = arith.constant 1.000000e+00 : f32
    %115 = vector.broadcast %cst_40 : f32 to vector<8x128xf32>
    %116 = arith.addf %115, %114 : vector<8x128xf32>
    %117 = arith.divf %115, %116 : vector<8x128xf32>
    %118 = math.tanh %112 : vector<8x128xf32>
    %119 = vector.extract_strided_slice %117 {offsets = [0, 0], sizes = [8, 32], strides = [1, 1]} : vector<8x128xf32> to vector<8x32xf32>
    %120 = vector.extract_strided_slice %117 {offsets = [0, 32], sizes = [8, 32], strides = [1, 1]} : vector<8x128xf32> to vector<8x32xf32>
    %121 = vector.extract_strided_slice %118 {offsets = [0, 64], sizes = [8, 32], strides = [1, 1]} : vector<8x128xf32> to vector<8x32xf32>
    %122 = vector.extract_strided_slice %117 {offsets = [0, 96], sizes = [8, 32], strides = [1, 1]} : vector<8x128xf32> to vector<8x32xf32>
    %123 = arith.mulf %120, %102 : vector<8x32xf32>
    %124 = arith.mulf %119, %121 : vector<8x32xf32>
    %125 = arith.addf %123, %124 : vector<8x32xf32>
    %126 = math.tanh %125 : vector<8x32xf32>
    %127 = arith.mulf %122, %126 : vector<8x32xf32>
    %128 = arith.index_cast %108 : i32 to index
    %c0_41 = arith.constant 0 : index
    %129 = vector.load %arg12[%128, %c0_41] : memref<64x32xf32, #tpu.memory_space<vmem>>, vector<8x32xf32>
    tpu.vector_store %arg12[%128, %c0_41], %127 {strides = array<i32>} : memref<64x32xf32, #tpu.memory_space<vmem>>, vector<8x32xf32>,
    %c5_i32 = arith.constant 5 : i32
    %c8_i32_42 = arith.constant 8 : i32
    %130 = arith.muli %c5_i32, %c8_i32_42 : i32
    %131 = tpu.assume_multiple %130, 8 : i32
    %132 = arith.index_cast %131 : i32 to index
    %c0_43 = arith.constant 0 : index
    %133 = vector.load %arg11[%132, %c0_43] : memref<64x128xf32, #tpu.memory_space<vmem>>, vector<8x128xf32>
    %cst_44 = arith.constant dense<0.000000e+00> : vector<8x128xf32>
    %134 = tpu.matmul %127, %10, %cst_44 {dimension_numbers = #tpu.dot_dimension_numbers<[1], [0], [0], [1], [0, 0, 1, 1], [], []>} : vector<8x32xf32>, vector<32x128xf32>, vector<8x128xf32> -> vector<8x128xf32>
    %135 = arith.addf %133, %134 : vector<8x128xf32>
    %136 = arith.negf %135 : vector<8x128xf32>
    %137 = math.exp %136 : vector<8x128xf32>
    %cst_45 = arith.constant 1.000000e+00 : f32
    %138 = vector.broadcast %cst_45 : f32 to vector<8x128xf32>
    %139 = arith.addf %138, %137 : vector<8x128xf32>
    %140 = arith.divf %138, %139 : vector<8x128xf32>
    %141 = math.tanh %135 : vector<8x128xf32>
    %142 = vector.extract_strided_slice %140 {offsets = [0, 0], sizes = [8, 32], strides = [1, 1]} : vector<8x128xf32> to vector<8x32xf32>
    %143 = vector.extract_strided_slice %140 {offsets = [0, 32], sizes = [8, 32], strides = [1, 1]} : vector<8x128xf32> to vector<8x32xf32>
    %144 = vector.extract_strided_slice %141 {offsets = [0, 64], sizes = [8, 32], strides = [1, 1]} : vector<8x128xf32> to vector<8x32xf32>
    %145 = vector.extract_strided_slice %140 {offsets = [0, 96], sizes = [8, 32], strides = [1, 1]} : vector<8x128xf32> to vector<8x32xf32>
    %146 = arith.mulf %143, %125 : vector<8x32xf32>
    %147 = arith.mulf %142, %144 : vector<8x32xf32>
    %148 = arith.addf %146, %147 : vector<8x32xf32>
    %149 = math.tanh %148 : vector<8x32xf32>
    %150 = arith.mulf %145, %149 : vector<8x32xf32>
    %151 = arith.index_cast %131 : i32 to index
    %c0_46 = arith.constant 0 : index
    %152 = vector.load %arg12[%151, %c0_46] : memref<64x32xf32, #tpu.memory_space<vmem>>, vector<8x32xf32>
    tpu.vector_store %arg12[%151, %c0_46], %150 {strides = array<i32>} : memref<64x32xf32, #tpu.memory_space<vmem>>, vector<8x32xf32>,
    %c6_i32 = arith.constant 6 : i32
    %c8_i32_47 = arith.constant 8 : i32
    %153 = arith.muli %c6_i32, %c8_i32_47 : i32
    %154 = tpu.assume_multiple %153, 8 : i32
    %155 = arith.index_cast %154 : i32 to index
    %c0_48 = arith.constant 0 : index
    %156 = vector.load %arg11[%155, %c0_48] : memref<64x128xf32, #tpu.memory_space<vmem>>, vector<8x128xf32>
    %cst_49 = arith.constant dense<0.000000e+00> : vector<8x128xf32>
    %157 = tpu.matmul %150, %10, %cst_49 {dimension_numbers = #tpu.dot_dimension_numbers<[1], [0], [0], [1], [0, 0, 1, 1], [], []>} : vector<8x32xf32>, vector<32x128xf32>, vector<8x128xf32> -> vector<8x128xf32>
    %158 = arith.addf %156, %157 : vector<8x128xf32>
    %159 = arith.negf %158 : vector<8x128xf32>
    %160 = math.exp %159 : vector<8x128xf32>
    %cst_50 = arith.constant 1.000000e+00 : f32
    %161 = vector.broadcast %cst_50 : f32 to vector<8x128xf32>
    %162 = arith.addf %161, %160 : vector<8x128xf32>
    %163 = arith.divf %161, %162 : vector<8x128xf32>
    %164 = math.tanh %158 : vector<8x128xf32>
    %165 = vector.extract_strided_slice %163 {offsets = [0, 0], sizes = [8, 32], strides = [1, 1]} : vector<8x128xf32> to vector<8x32xf32>
    %166 = vector.extract_strided_slice %163 {offsets = [0, 32], sizes = [8, 32], strides = [1, 1]} : vector<8x128xf32> to vector<8x32xf32>
    %167 = vector.extract_strided_slice %164 {offsets = [0, 64], sizes = [8, 32], strides = [1, 1]} : vector<8x128xf32> to vector<8x32xf32>
    %168 = vector.extract_strided_slice %163 {offsets = [0, 96], sizes = [8, 32], strides = [1, 1]} : vector<8x128xf32> to vector<8x32xf32>
    %169 = arith.mulf %166, %148 : vector<8x32xf32>
    %170 = arith.mulf %165, %167 : vector<8x32xf32>
    %171 = arith.addf %169, %170 : vector<8x32xf32>
    %172 = math.tanh %171 : vector<8x32xf32>
    %173 = arith.mulf %168, %172 : vector<8x32xf32>
    %174 = arith.index_cast %154 : i32 to index
    %c0_51 = arith.constant 0 : index
    %175 = vector.load %arg12[%174, %c0_51] : memref<64x32xf32, #tpu.memory_space<vmem>>, vector<8x32xf32>
    tpu.vector_store %arg12[%174, %c0_51], %173 {strides = array<i32>} : memref<64x32xf32, #tpu.memory_space<vmem>>, vector<8x32xf32>,
    %c7_i32 = arith.constant 7 : i32
    %c8_i32_52 = arith.constant 8 : i32
    %176 = arith.muli %c7_i32, %c8_i32_52 : i32
    %177 = tpu.assume_multiple %176, 8 : i32
    %178 = arith.index_cast %177 : i32 to index
    %c0_53 = arith.constant 0 : index
    %179 = vector.load %arg11[%178, %c0_53] : memref<64x128xf32, #tpu.memory_space<vmem>>, vector<8x128xf32>
    %cst_54 = arith.constant dense<0.000000e+00> : vector<8x128xf32>
    %180 = tpu.matmul %173, %10, %cst_54 {dimension_numbers = #tpu.dot_dimension_numbers<[1], [0], [0], [1], [0, 0, 1, 1], [], []>} : vector<8x32xf32>, vector<32x128xf32>, vector<8x128xf32> -> vector<8x128xf32>
    %181 = arith.addf %179, %180 : vector<8x128xf32>
    %182 = arith.negf %181 : vector<8x128xf32>
    %183 = math.exp %182 : vector<8x128xf32>
    %cst_55 = arith.constant 1.000000e+00 : f32
    %184 = vector.broadcast %cst_55 : f32 to vector<8x128xf32>
    %185 = arith.addf %184, %183 : vector<8x128xf32>
    %186 = arith.divf %184, %185 : vector<8x128xf32>
    %187 = math.tanh %181 : vector<8x128xf32>
    %188 = vector.extract_strided_slice %186 {offsets = [0, 0], sizes = [8, 32], strides = [1, 1]} : vector<8x128xf32> to vector<8x32xf32>
    %189 = vector.extract_strided_slice %186 {offsets = [0, 32], sizes = [8, 32], strides = [1, 1]} : vector<8x128xf32> to vector<8x32xf32>
    %190 = vector.extract_strided_slice %187 {offsets = [0, 64], sizes = [8, 32], strides = [1, 1]} : vector<8x128xf32> to vector<8x32xf32>
    %191 = vector.extract_strided_slice %186 {offsets = [0, 96], sizes = [8, 32], strides = [1, 1]} : vector<8x128xf32> to vector<8x32xf32>
    %192 = arith.mulf %189, %171 : vector<8x32xf32>
    %193 = arith.mulf %188, %190 : vector<8x32xf32>
    %194 = arith.addf %192, %193 : vector<8x32xf32>
    %195 = math.tanh %194 : vector<8x32xf32>
    %196 = arith.mulf %191, %195 : vector<8x32xf32>
    %197 = arith.index_cast %177 : i32 to index
    %c0_56 = arith.constant 0 : index
    %198 = vector.load %arg12[%197, %c0_56] : memref<64x32xf32, #tpu.memory_space<vmem>>, vector<8x32xf32>
    tpu.vector_store %arg12[%197, %c0_56], %196 {strides = array<i32>} : memref<64x32xf32, #tpu.memory_space<vmem>>, vector<8x32xf32>,
    %c8_i32_57 = arith.constant 8 : i32
    %c0_58 = arith.constant 0 : index
    %c0_59 = arith.constant 0 : index
    %c0_60 = arith.constant 0 : index
    %199 = vector.load %arg9[%c0_58, %c0_59, %c0_60] : memref<2x8x32xf32, #tpu.memory_space<vmem>>, vector<1x8x32xf32>
    %200 = vector.shape_cast %199 : vector<1x8x32xf32> to vector<8x32xf32>
    %201 = vector.shape_cast %196 : vector<8x32xf32> to vector<1x8x32xf32>
    tpu.vector_store %arg9[%c0_58, %c0_59, %c0_60], %201 {strides = array<i32>} : memref<2x8x32xf32, #tpu.memory_space<vmem>>, vector<1x8x32xf32>,
    %c0_61 = arith.constant 0 : index
    %c0_62 = arith.constant 0 : index
    %c0_63 = arith.constant 0 : index
    %202 = vector.load %arg10[%c0_61, %c0_62, %c0_63] : memref<2x8x32xf32, #tpu.memory_space<vmem>>, vector<1x8x32xf32>
    %203 = vector.shape_cast %202 : vector<1x8x32xf32> to vector<8x32xf32>
    %204 = vector.shape_cast %194 : vector<8x32xf32> to vector<1x8x32xf32>
    tpu.vector_store %arg10[%c0_61, %c0_62, %c0_63], %204 {strides = array<i32>} : memref<2x8x32xf32, #tpu.memory_space<vmem>>, vector<1x8x32xf32>,
    %c0_64 = arith.constant 0 : index
    %c0_65 = arith.constant 0 : index
    %205 = vector.load %arg12[%c0_64, %c0_65] : memref<64x32xf32, #tpu.memory_space<vmem>>, vector<64x32xf32>
    %c1 = arith.constant 1 : index
    %c0_66 = arith.constant 0 : index
    %c0_67 = arith.constant 0 : index
    %206 = vector.load %arg3[%c1, %c0_66, %c0_67] : memref<2x32x128xf32, #tpu.memory_space<vmem>>, vector<1x32x128xf32>
    %207 = vector.shape_cast %206 : vector<1x32x128xf32> to vector<32x128xf32>
    %cst_68 = arith.constant dense<0.000000e+00> : vector<64x128xf32>
    %208 = tpu.matmul %205, %207, %cst_68 {dimension_numbers = #tpu.dot_dimension_numbers<[1], [0], [0], [1], [0, 0, 1, 1], [], []>} : vector<64x32xf32>, vector<32x128xf32>, vector<64x128xf32> -> vector<64x128xf32>
    %c1_69 = arith.constant 1 : index
    %c0_70 = arith.constant 0 : index
    %c0_71 = arith.constant 0 : index
    %209 = vector.load %arg5[%c1_69, %c0_70, %c0_71] : memref<2x1x128xf32, #tpu.memory_space<vmem>>, vector<1x1x128xf32>
    %210 = vector.shape_cast %209 : vector<1x1x128xf32> to vector<1x128xf32>
    %211 = vector.broadcast %210 : vector<1x128xf32> to vector<64x128xf32>
    %212 = arith.addf %208, %211 : vector<64x128xf32>
    %c0_72 = arith.constant 0 : index
    %c0_73 = arith.constant 0 : index
    %213 = vector.load %arg11[%c0_72, %c0_73] : memref<64x128xf32, #tpu.memory_space<vmem>>, vector<64x128xf32>
    tpu.vector_store %arg11[%c0_72, %c0_73], %212 {strides = array<i32>} : memref<64x128xf32, #tpu.memory_space<vmem>>, vector<64x128xf32>,
    %c1_74 = arith.constant 1 : index
    %c0_75 = arith.constant 0 : index
    %c0_76 = arith.constant 0 : index
    %214 = vector.load %arg4[%c1_74, %c0_75, %c0_76] : memref<2x32x128xf32, #tpu.memory_space<vmem>>, vector<1x32x128xf32>
    %215 = vector.shape_cast %214 : vector<1x32x128xf32> to vector<32x128xf32>
    %c1_77 = arith.constant 1 : index
    %c0_78 = arith.constant 0 : index
    %c0_79 = arith.constant 0 : index
    %216 = vector.load %arg1[%c1_77, %c0_78, %c0_79] : memref<2x8x32xf32, #tpu.memory_space<vmem>>, vector<1x8x32xf32>
    %217 = vector.shape_cast %216 : vector<1x8x32xf32> to vector<8x32xf32>
    %c1_80 = arith.constant 1 : index
    %c0_81 = arith.constant 0 : index
    %c0_82 = arith.constant 0 : index
    %218 = vector.load %arg2[%c1_80, %c0_81, %c0_82] : memref<2x8x32xf32, #tpu.memory_space<vmem>>, vector<1x8x32xf32>
    %219 = vector.shape_cast %218 : vector<1x8x32xf32> to vector<8x32xf32>
    %c0_i32_83 = arith.constant 0 : i32
    %c8_i32_84 = arith.constant 8 : i32
    %220 = arith.muli %c0_i32_83, %c8_i32_84 : i32
    %221 = tpu.assume_multiple %220, 8 : i32
    %222 = arith.index_cast %221 : i32 to index
    %c0_85 = arith.constant 0 : index
    %223 = vector.load %arg11[%222, %c0_85] : memref<64x128xf32, #tpu.memory_space<vmem>>, vector<8x128xf32>
    %cst_86 = arith.constant dense<0.000000e+00> : vector<8x128xf32>
    %224 = tpu.matmul %217, %215, %cst_86 {dimension_numbers = #tpu.dot_dimension_numbers<[1], [0], [0], [1], [0, 0, 1, 1], [], []>} : vector<8x32xf32>, vector<32x128xf32>, vector<8x128xf32> -> vector<8x128xf32>
    %225 = arith.addf %223, %224 : vector<8x128xf32>
    %226 = arith.negf %225 : vector<8x128xf32>
    %227 = math.exp %226 : vector<8x128xf32>
    %cst_87 = arith.constant 1.000000e+00 : f32
    %228 = vector.broadcast %cst_87 : f32 to vector<8x128xf32>
    %229 = arith.addf %228, %227 : vector<8x128xf32>
    %230 = arith.divf %228, %229 : vector<8x128xf32>
    %231 = math.tanh %225 : vector<8x128xf32>
    %232 = vector.extract_strided_slice %230 {offsets = [0, 0], sizes = [8, 32], strides = [1, 1]} : vector<8x128xf32> to vector<8x32xf32>
    %233 = vector.extract_strided_slice %230 {offsets = [0, 32], sizes = [8, 32], strides = [1, 1]} : vector<8x128xf32> to vector<8x32xf32>
    %234 = vector.extract_strided_slice %231 {offsets = [0, 64], sizes = [8, 32], strides = [1, 1]} : vector<8x128xf32> to vector<8x32xf32>
    %235 = vector.extract_strided_slice %230 {offsets = [0, 96], sizes = [8, 32], strides = [1, 1]} : vector<8x128xf32> to vector<8x32xf32>
    %236 = arith.mulf %233, %219 : vector<8x32xf32>
    %237 = arith.mulf %232, %234 : vector<8x32xf32>
    %238 = arith.addf %236, %237 : vector<8x32xf32>
    %239 = math.tanh %238 : vector<8x32xf32>
    %240 = arith.mulf %235, %239 : vector<8x32xf32>
    %241 = arith.index_cast %221 : i32 to index
    %c0_88 = arith.constant 0 : index
    %242 = vector.load %arg12[%241, %c0_88] : memref<64x32xf32, #tpu.memory_space<vmem>>, vector<8x32xf32>
    tpu.vector_store %arg12[%241, %c0_88], %240 {strides = array<i32>} : memref<64x32xf32, #tpu.memory_space<vmem>>, vector<8x32xf32>,
    %c1_i32_89 = arith.constant 1 : i32
    %c8_i32_90 = arith.constant 8 : i32
    %243 = arith.muli %c1_i32_89, %c8_i32_90 : i32
    %244 = tpu.assume_multiple %243, 8 : i32
    %245 = arith.index_cast %244 : i32 to index
    %c0_91 = arith.constant 0 : index
    %246 = vector.load %arg11[%245, %c0_91] : memref<64x128xf32, #tpu.memory_space<vmem>>, vector<8x128xf32>
    %cst_92 = arith.constant dense<0.000000e+00> : vector<8x128xf32>
    %247 = tpu.matmul %240, %215, %cst_92 {dimension_numbers = #tpu.dot_dimension_numbers<[1], [0], [0], [1], [0, 0, 1, 1], [], []>} : vector<8x32xf32>, vector<32x128xf32>, vector<8x128xf32> -> vector<8x128xf32>
    %248 = arith.addf %246, %247 : vector<8x128xf32>
    %249 = arith.negf %248 : vector<8x128xf32>
    %250 = math.exp %249 : vector<8x128xf32>
    %cst_93 = arith.constant 1.000000e+00 : f32
    %251 = vector.broadcast %cst_93 : f32 to vector<8x128xf32>
    %252 = arith.addf %251, %250 : vector<8x128xf32>
    %253 = arith.divf %251, %252 : vector<8x128xf32>
    %254 = math.tanh %248 : vector<8x128xf32>
    %255 = vector.extract_strided_slice %253 {offsets = [0, 0], sizes = [8, 32], strides = [1, 1]} : vector<8x128xf32> to vector<8x32xf32>
    %256 = vector.extract_strided_slice %253 {offsets = [0, 32], sizes = [8, 32], strides = [1, 1]} : vector<8x128xf32> to vector<8x32xf32>
    %257 = vector.extract_strided_slice %254 {offsets = [0, 64], sizes = [8, 32], strides = [1, 1]} : vector<8x128xf32> to vector<8x32xf32>
    %258 = vector.extract_strided_slice %253 {offsets = [0, 96], sizes = [8, 32], strides = [1, 1]} : vector<8x128xf32> to vector<8x32xf32>
    %259 = arith.mulf %256, %238 : vector<8x32xf32>
    %260 = arith.mulf %255, %257 : vector<8x32xf32>
    %261 = arith.addf %259, %260 : vector<8x32xf32>
    %262 = math.tanh %261 : vector<8x32xf32>
    %263 = arith.mulf %258, %262 : vector<8x32xf32>
    %264 = arith.index_cast %244 : i32 to index
    %c0_94 = arith.constant 0 : index
    %265 = vector.load %arg12[%264, %c0_94] : memref<64x32xf32, #tpu.memory_space<vmem>>, vector<8x32xf32>
    tpu.vector_store %arg12[%264, %c0_94], %263 {strides = array<i32>} : memref<64x32xf32, #tpu.memory_space<vmem>>, vector<8x32xf32>,
    %c2_i32_95 = arith.constant 2 : i32
    %c8_i32_96 = arith.constant 8 : i32
    %266 = arith.muli %c2_i32_95, %c8_i32_96 : i32
    %267 = tpu.assume_multiple %266, 8 : i32
    %268 = arith.index_cast %267 : i32 to index
    %c0_97 = arith.constant 0 : index
    %269 = vector.load %arg11[%268, %c0_97] : memref<64x128xf32, #tpu.memory_space<vmem>>, vector<8x128xf32>
    %cst_98 = arith.constant dense<0.000000e+00> : vector<8x128xf32>
    %270 = tpu.matmul %263, %215, %cst_98 {dimension_numbers = #tpu.dot_dimension_numbers<[1], [0], [0], [1], [0, 0, 1, 1], [], []>} : vector<8x32xf32>, vector<32x128xf32>, vector<8x128xf32> -> vector<8x128xf32>
    %271 = arith.addf %269, %270 : vector<8x128xf32>
    %272 = arith.negf %271 : vector<8x128xf32>
    %273 = math.exp %272 : vector<8x128xf32>
    %cst_99 = arith.constant 1.000000e+00 : f32
    %274 = vector.broadcast %cst_99 : f32 to vector<8x128xf32>
    %275 = arith.addf %274, %273 : vector<8x128xf32>
    %276 = arith.divf %274, %275 : vector<8x128xf32>
    %277 = math.tanh %271 : vector<8x128xf32>
    %278 = vector.extract_strided_slice %276 {offsets = [0, 0], sizes = [8, 32], strides = [1, 1]} : vector<8x128xf32> to vector<8x32xf32>
    %279 = vector.extract_strided_slice %276 {offsets = [0, 32], sizes = [8, 32], strides = [1, 1]} : vector<8x128xf32> to vector<8x32xf32>
    %280 = vector.extract_strided_slice %277 {offsets = [0, 64], sizes = [8, 32], strides = [1, 1]} : vector<8x128xf32> to vector<8x32xf32>
    %281 = vector.extract_strided_slice %276 {offsets = [0, 96], sizes = [8, 32], strides = [1, 1]} : vector<8x128xf32> to vector<8x32xf32>
    %282 = arith.mulf %279, %261 : vector<8x32xf32>
    %283 = arith.mulf %278, %280 : vector<8x32xf32>
    %284 = arith.addf %282, %283 : vector<8x32xf32>
    %285 = math.tanh %284 : vector<8x32xf32>
    %286 = arith.mulf %281, %285 : vector<8x32xf32>
    %287 = arith.index_cast %267 : i32 to index
    %c0_100 = arith.constant 0 : index
    %288 = vector.load %arg12[%287, %c0_100] : memref<64x32xf32, #tpu.memory_space<vmem>>, vector<8x32xf32>
    tpu.vector_store %arg12[%287, %c0_100], %286 {strides = array<i32>} : memref<64x32xf32, #tpu.memory_space<vmem>>, vector<8x32xf32>,
    %c3_i32_101 = arith.constant 3 : i32
    %c8_i32_102 = arith.constant 8 : i32
    %289 = arith.muli %c3_i32_101, %c8_i32_102 : i32
    %290 = tpu.assume_multiple %289, 8 : i32
    %291 = arith.index_cast %290 : i32 to index
    %c0_103 = arith.constant 0 : index
    %292 = vector.load %arg11[%291, %c0_103] : memref<64x128xf32, #tpu.memory_space<vmem>>, vector<8x128xf32>
    %cst_104 = arith.constant dense<0.000000e+00> : vector<8x128xf32>
    %293 = tpu.matmul %286, %215, %cst_104 {dimension_numbers = #tpu.dot_dimension_numbers<[1], [0], [0], [1], [0, 0, 1, 1], [], []>} : vector<8x32xf32>, vector<32x128xf32>, vector<8x128xf32> -> vector<8x128xf32>
    %294 = arith.addf %292, %293 : vector<8x128xf32>
    %295 = arith.negf %294 : vector<8x128xf32>
    %296 = math.exp %295 : vector<8x128xf32>
    %cst_105 = arith.constant 1.000000e+00 : f32
    %297 = vector.broadcast %cst_105 : f32 to vector<8x128xf32>
    %298 = arith.addf %297, %296 : vector<8x128xf32>
    %299 = arith.divf %297, %298 : vector<8x128xf32>
    %300 = math.tanh %294 : vector<8x128xf32>
    %301 = vector.extract_strided_slice %299 {offsets = [0, 0], sizes = [8, 32], strides = [1, 1]} : vector<8x128xf32> to vector<8x32xf32>
    %302 = vector.extract_strided_slice %299 {offsets = [0, 32], sizes = [8, 32], strides = [1, 1]} : vector<8x128xf32> to vector<8x32xf32>
    %303 = vector.extract_strided_slice %300 {offsets = [0, 64], sizes = [8, 32], strides = [1, 1]} : vector<8x128xf32> to vector<8x32xf32>
    %304 = vector.extract_strided_slice %299 {offsets = [0, 96], sizes = [8, 32], strides = [1, 1]} : vector<8x128xf32> to vector<8x32xf32>
    %305 = arith.mulf %302, %284 : vector<8x32xf32>
    %306 = arith.mulf %301, %303 : vector<8x32xf32>
    %307 = arith.addf %305, %306 : vector<8x32xf32>
    %308 = math.tanh %307 : vector<8x32xf32>
    %309 = arith.mulf %304, %308 : vector<8x32xf32>
    %310 = arith.index_cast %290 : i32 to index
    %c0_106 = arith.constant 0 : index
    %311 = vector.load %arg12[%310, %c0_106] : memref<64x32xf32, #tpu.memory_space<vmem>>, vector<8x32xf32>
    tpu.vector_store %arg12[%310, %c0_106], %309 {strides = array<i32>} : memref<64x32xf32, #tpu.memory_space<vmem>>, vector<8x32xf32>,
    %c4_i32_107 = arith.constant 4 : i32
    %c8_i32_108 = arith.constant 8 : i32
    %312 = arith.muli %c4_i32_107, %c8_i32_108 : i32
    %313 = tpu.assume_multiple %312, 8 : i32
    %314 = arith.index_cast %313 : i32 to index
    %c0_109 = arith.constant 0 : index
    %315 = vector.load %arg11[%314, %c0_109] : memref<64x128xf32, #tpu.memory_space<vmem>>, vector<8x128xf32>
    %cst_110 = arith.constant dense<0.000000e+00> : vector<8x128xf32>
    %316 = tpu.matmul %309, %215, %cst_110 {dimension_numbers = #tpu.dot_dimension_numbers<[1], [0], [0], [1], [0, 0, 1, 1], [], []>} : vector<8x32xf32>, vector<32x128xf32>, vector<8x128xf32> -> vector<8x128xf32>
    %317 = arith.addf %315, %316 : vector<8x128xf32>
    %318 = arith.negf %317 : vector<8x128xf32>
    %319 = math.exp %318 : vector<8x128xf32>
    %cst_111 = arith.constant 1.000000e+00 : f32
    %320 = vector.broadcast %cst_111 : f32 to vector<8x128xf32>
    %321 = arith.addf %320, %319 : vector<8x128xf32>
    %322 = arith.divf %320, %321 : vector<8x128xf32>
    %323 = math.tanh %317 : vector<8x128xf32>
    %324 = vector.extract_strided_slice %322 {offsets = [0, 0], sizes = [8, 32], strides = [1, 1]} : vector<8x128xf32> to vector<8x32xf32>
    %325 = vector.extract_strided_slice %322 {offsets = [0, 32], sizes = [8, 32], strides = [1, 1]} : vector<8x128xf32> to vector<8x32xf32>
    %326 = vector.extract_strided_slice %323 {offsets = [0, 64], sizes = [8, 32], strides = [1, 1]} : vector<8x128xf32> to vector<8x32xf32>
    %327 = vector.extract_strided_slice %322 {offsets = [0, 96], sizes = [8, 32], strides = [1, 1]} : vector<8x128xf32> to vector<8x32xf32>
    %328 = arith.mulf %325, %307 : vector<8x32xf32>
    %329 = arith.mulf %324, %326 : vector<8x32xf32>
    %330 = arith.addf %328, %329 : vector<8x32xf32>
    %331 = math.tanh %330 : vector<8x32xf32>
    %332 = arith.mulf %327, %331 : vector<8x32xf32>
    %333 = arith.index_cast %313 : i32 to index
    %c0_112 = arith.constant 0 : index
    %334 = vector.load %arg12[%333, %c0_112] : memref<64x32xf32, #tpu.memory_space<vmem>>, vector<8x32xf32>
    tpu.vector_store %arg12[%333, %c0_112], %332 {strides = array<i32>} : memref<64x32xf32, #tpu.memory_space<vmem>>, vector<8x32xf32>,
    %c5_i32_113 = arith.constant 5 : i32
    %c8_i32_114 = arith.constant 8 : i32
    %335 = arith.muli %c5_i32_113, %c8_i32_114 : i32
    %336 = tpu.assume_multiple %335, 8 : i32
    %337 = arith.index_cast %336 : i32 to index
    %c0_115 = arith.constant 0 : index
    %338 = vector.load %arg11[%337, %c0_115] : memref<64x128xf32, #tpu.memory_space<vmem>>, vector<8x128xf32>
    %cst_116 = arith.constant dense<0.000000e+00> : vector<8x128xf32>
    %339 = tpu.matmul %332, %215, %cst_116 {dimension_numbers = #tpu.dot_dimension_numbers<[1], [0], [0], [1], [0, 0, 1, 1], [], []>} : vector<8x32xf32>, vector<32x128xf32>, vector<8x128xf32> -> vector<8x128xf32>
    %340 = arith.addf %338, %339 : vector<8x128xf32>
    %341 = arith.negf %340 : vector<8x128xf32>
    %342 = math.exp %341 : vector<8x128xf32>
    %cst_117 = arith.constant 1.000000e+00 : f32
    %343 = vector.broadcast %cst_117 : f32 to vector<8x128xf32>
    %344 = arith.addf %343, %342 : vector<8x128xf32>
    %345 = arith.divf %343, %344 : vector<8x128xf32>
    %346 = math.tanh %340 : vector<8x128xf32>
    %347 = vector.extract_strided_slice %345 {offsets = [0, 0], sizes = [8, 32], strides = [1, 1]} : vector<8x128xf32> to vector<8x32xf32>
    %348 = vector.extract_strided_slice %345 {offsets = [0, 32], sizes = [8, 32], strides = [1, 1]} : vector<8x128xf32> to vector<8x32xf32>
    %349 = vector.extract_strided_slice %346 {offsets = [0, 64], sizes = [8, 32], strides = [1, 1]} : vector<8x128xf32> to vector<8x32xf32>
    %350 = vector.extract_strided_slice %345 {offsets = [0, 96], sizes = [8, 32], strides = [1, 1]} : vector<8x128xf32> to vector<8x32xf32>
    %351 = arith.mulf %348, %330 : vector<8x32xf32>
    %352 = arith.mulf %347, %349 : vector<8x32xf32>
    %353 = arith.addf %351, %352 : vector<8x32xf32>
    %354 = math.tanh %353 : vector<8x32xf32>
    %355 = arith.mulf %350, %354 : vector<8x32xf32>
    %356 = arith.index_cast %336 : i32 to index
    %c0_118 = arith.constant 0 : index
    %357 = vector.load %arg12[%356, %c0_118] : memref<64x32xf32, #tpu.memory_space<vmem>>, vector<8x32xf32>
    tpu.vector_store %arg12[%356, %c0_118], %355 {strides = array<i32>} : memref<64x32xf32, #tpu.memory_space<vmem>>, vector<8x32xf32>,
    %c6_i32_119 = arith.constant 6 : i32
    %c8_i32_120 = arith.constant 8 : i32
    %358 = arith.muli %c6_i32_119, %c8_i32_120 : i32
    %359 = tpu.assume_multiple %358, 8 : i32
    %360 = arith.index_cast %359 : i32 to index
    %c0_121 = arith.constant 0 : index
    %361 = vector.load %arg11[%360, %c0_121] : memref<64x128xf32, #tpu.memory_space<vmem>>, vector<8x128xf32>
    %cst_122 = arith.constant dense<0.000000e+00> : vector<8x128xf32>
    %362 = tpu.matmul %355, %215, %cst_122 {dimension_numbers = #tpu.dot_dimension_numbers<[1], [0], [0], [1], [0, 0, 1, 1], [], []>} : vector<8x32xf32>, vector<32x128xf32>, vector<8x128xf32> -> vector<8x128xf32>
    %363 = arith.addf %361, %362 : vector<8x128xf32>
    %364 = arith.negf %363 : vector<8x128xf32>
    %365 = math.exp %364 : vector<8x128xf32>
    %cst_123 = arith.constant 1.000000e+00 : f32
    %366 = vector.broadcast %cst_123 : f32 to vector<8x128xf32>
    %367 = arith.addf %366, %365 : vector<8x128xf32>
    %368 = arith.divf %366, %367 : vector<8x128xf32>
    %369 = math.tanh %363 : vector<8x128xf32>
    %370 = vector.extract_strided_slice %368 {offsets = [0, 0], sizes = [8, 32], strides = [1, 1]} : vector<8x128xf32> to vector<8x32xf32>
    %371 = vector.extract_strided_slice %368 {offsets = [0, 32], sizes = [8, 32], strides = [1, 1]} : vector<8x128xf32> to vector<8x32xf32>
    %372 = vector.extract_strided_slice %369 {offsets = [0, 64], sizes = [8, 32], strides = [1, 1]} : vector<8x128xf32> to vector<8x32xf32>
    %373 = vector.extract_strided_slice %368 {offsets = [0, 96], sizes = [8, 32], strides = [1, 1]} : vector<8x128xf32> to vector<8x32xf32>
    %374 = arith.mulf %371, %353 : vector<8x32xf32>
    %375 = arith.mulf %370, %372 : vector<8x32xf32>
    %376 = arith.addf %374, %375 : vector<8x32xf32>
    %377 = math.tanh %376 : vector<8x32xf32>
    %378 = arith.mulf %373, %377 : vector<8x32xf32>
    %379 = arith.index_cast %359 : i32 to index
    %c0_124 = arith.constant 0 : index
    %380 = vector.load %arg12[%379, %c0_124] : memref<64x32xf32, #tpu.memory_space<vmem>>, vector<8x32xf32>
    tpu.vector_store %arg12[%379, %c0_124], %378 {strides = array<i32>} : memref<64x32xf32, #tpu.memory_space<vmem>>, vector<8x32xf32>,
    %c7_i32_125 = arith.constant 7 : i32
    %c8_i32_126 = arith.constant 8 : i32
    %381 = arith.muli %c7_i32_125, %c8_i32_126 : i32
    %382 = tpu.assume_multiple %381, 8 : i32
    %383 = arith.index_cast %382 : i32 to index
    %c0_127 = arith.constant 0 : index
    %384 = vector.load %arg11[%383, %c0_127] : memref<64x128xf32, #tpu.memory_space<vmem>>, vector<8x128xf32>
    %cst_128 = arith.constant dense<0.000000e+00> : vector<8x128xf32>
    %385 = tpu.matmul %378, %215, %cst_128 {dimension_numbers = #tpu.dot_dimension_numbers<[1], [0], [0], [1], [0, 0, 1, 1], [], []>} : vector<8x32xf32>, vector<32x128xf32>, vector<8x128xf32> -> vector<8x128xf32>
    %386 = arith.addf %384, %385 : vector<8x128xf32>
    %387 = arith.negf %386 : vector<8x128xf32>
    %388 = math.exp %387 : vector<8x128xf32>
    %cst_129 = arith.constant 1.000000e+00 : f32
    %389 = vector.broadcast %cst_129 : f32 to vector<8x128xf32>
    %390 = arith.addf %389, %388 : vector<8x128xf32>
    %391 = arith.divf %389, %390 : vector<8x128xf32>
    %392 = math.tanh %386 : vector<8x128xf32>
    %393 = vector.extract_strided_slice %391 {offsets = [0, 0], sizes = [8, 32], strides = [1, 1]} : vector<8x128xf32> to vector<8x32xf32>
    %394 = vector.extract_strided_slice %391 {offsets = [0, 32], sizes = [8, 32], strides = [1, 1]} : vector<8x128xf32> to vector<8x32xf32>
    %395 = vector.extract_strided_slice %392 {offsets = [0, 64], sizes = [8, 32], strides = [1, 1]} : vector<8x128xf32> to vector<8x32xf32>
    %396 = vector.extract_strided_slice %391 {offsets = [0, 96], sizes = [8, 32], strides = [1, 1]} : vector<8x128xf32> to vector<8x32xf32>
    %397 = arith.mulf %394, %376 : vector<8x32xf32>
    %398 = arith.mulf %393, %395 : vector<8x32xf32>
    %399 = arith.addf %397, %398 : vector<8x32xf32>
    %400 = math.tanh %399 : vector<8x32xf32>
    %401 = arith.mulf %396, %400 : vector<8x32xf32>
    %402 = arith.index_cast %382 : i32 to index
    %c0_130 = arith.constant 0 : index
    %403 = vector.load %arg12[%402, %c0_130] : memref<64x32xf32, #tpu.memory_space<vmem>>, vector<8x32xf32>
    tpu.vector_store %arg12[%402, %c0_130], %401 {strides = array<i32>} : memref<64x32xf32, #tpu.memory_space<vmem>>, vector<8x32xf32>,
    %c8_i32_131 = arith.constant 8 : i32
    %c1_132 = arith.constant 1 : index
    %c0_133 = arith.constant 0 : index
    %c0_134 = arith.constant 0 : index
    %404 = vector.load %arg9[%c1_132, %c0_133, %c0_134] : memref<2x8x32xf32, #tpu.memory_space<vmem>>, vector<1x8x32xf32>
    %405 = vector.shape_cast %404 : vector<1x8x32xf32> to vector<8x32xf32>
    %406 = vector.shape_cast %401 : vector<8x32xf32> to vector<1x8x32xf32>
    tpu.vector_store %arg9[%c1_132, %c0_133, %c0_134], %406 {strides = array<i32>} : memref<2x8x32xf32, #tpu.memory_space<vmem>>, vector<1x8x32xf32>,
    %c1_135 = arith.constant 1 : index
    %c0_136 = arith.constant 0 : index
    %c0_137 = arith.constant 0 : index
    %407 = vector.load %arg10[%c1_135, %c0_136, %c0_137] : memref<2x8x32xf32, #tpu.memory_space<vmem>>, vector<1x8x32xf32>
    %408 = vector.shape_cast %407 : vector<1x8x32xf32> to vector<8x32xf32>
    %409 = vector.shape_cast %399 : vector<8x32xf32> to vector<1x8x32xf32>
    tpu.vector_store %arg10[%c1_135, %c0_136, %c0_137], %409 {strides = array<i32>} : memref<2x8x32xf32, #tpu.memory_space<vmem>>, vector<1x8x32xf32>,
    %c0_138 = arith.constant 0 : index
    %c0_139 = arith.constant 0 : index
    %410 = vector.load %arg12[%c0_138, %c0_139] : memref<64x32xf32, #tpu.memory_space<vmem>>, vector<64x32xf32>
    %c0_140 = arith.constant 0 : index
    %c0_141 = arith.constant 0 : index
    %411 = vector.load %arg6[%c0_140, %c0_141] : memref<32x128xf32, #tpu.memory_space<vmem>>, vector<32x128xf32>
    %cst_142 = arith.constant dense<0.000000e+00> : vector<64x128xf32>
    %412 = tpu.matmul %410, %411, %cst_142 {dimension_numbers = #tpu.dot_dimension_numbers<[1], [0], [0], [1], [0, 0, 1, 1], [], []>} : vector<64x32xf32>, vector<32x128xf32>, vector<64x128xf32> -> vector<64x128xf32>
    %c0_143 = arith.constant 0 : index
    %c0_144 = arith.constant 0 : index
    %413 = vector.load %arg7[%c0_143, %c0_144] : memref<1x128xf32, #tpu.memory_space<vmem>>, vector<1x128xf32>
    %414 = vector.broadcast %413 : vector<1x128xf32> to vector<64x128xf32>
    %415 = arith.addf %412, %414 : vector<64x128xf32>
    %c0_145 = arith.constant 0 : index
    %c0_146 = arith.constant 0 : index
    %416 = vector.load %arg8[%c0_145, %c0_146] : memref<64x128xf32, #tpu.memory_space<vmem>>, vector<64x128xf32>
    tpu.vector_store %arg8[%c0_145, %c0_146], %415 {strides = array<i32>} : memref<64x128xf32, #tpu.memory_space<vmem>>, vector<64x128xf32>,
    return
  }
}

</mosaic_0001>

<llo_original>
// kernel: tpu_custom_call.1
$region0: #{tpu_custom_call.1}
  #allocation0 [shape = 'u32[]', space=smem, size = 0x4, offset = 0x4, fixed_abs, tag = 'smem constant byte address 0x4 - core index']
  #allocation1 [shape = 'u32[72,128]{1,0:T(1,128)}', space=vmem, size = 0x9000, scoped, tag = 'internal scratch']
  #allocation2 [shape = 'f32[64,128]{1,0:T(8,128)}', space=vmem, size = 0x8000, scoped, tag = 'scratch operand']
  #allocation3 [shape = 'f32[64,32]{1,0:T(8,128)}', space=vmem, size = 0x8000, scoped, tag = 'scratch operand']
  %s0 = inlined_call_operand.vmem [shape: f32[64,32], index: 0, kind: input, shape index: {}]
  %s1 = inlined_call_operand.hbm [shape: f32[2,8,32], index: 1, kind: input, shape index: {}]
  %s2 = inlined_call_operand.hbm [shape: f32[2,8,32], index: 2, kind: input, shape index: {}]
  %s3 = inlined_call_operand.vmem [shape: f32[2,32,128], index: 3, kind: input, shape index: {}]
  %s4 = inlined_call_operand.hbm [shape: f32[2,32,128], index: 4, kind: input, shape index: {}]
  %s5 = inlined_call_operand.vmem [shape: f32[2,1,128], index: 5, kind: input, shape index: {}]
  %s6 = inlined_call_operand.vmem [shape: f32[32,128], index: 6, kind: input, shape index: {}]
  %s7 = inlined_call_operand.vmem [shape: f32[1,128], index: 7, kind: input, shape index: {}]
  %s8 = inlined_call_operand.hbm [shape: f32[64,128], index: 8, kind: output, shape index: {0}]
  %s9 = inlined_call_operand.hbm [shape: f32[2,8,32], index: 9, kind: output, shape index: {1}]
  %s10 = inlined_call_operand.hbm [shape: f32[2,8,32], index: 10, kind: output, shape index: {2}]
  %11 = xla_tuple %s8, %s9, %s10
  %s12 = sld [smem:[#allocation0]]
  $region70: #{tpu_custom_call.1} parent=0
    _
  %s14 = ssub.s32 1, %s12
  %s15 = scalar_select 0, %s14, %s12
  $region1: #{tpu_custom_call.1} parent=0
    #allocation4 [shape = 'u8[8192]{0}', space=vmem, size = 0x2000, scoped, tag = 'input window, operand 1, single buffered']
    #allocation5 [shape = 's32[1]{0}', space=sflag, size = 0x4, scoped, tag = 'scoped memory for tpu_custom_call.1']
    #allocation6 [shape = 's32[1]{0}', space=sflag, size = 0x4, scoped, tag = 'scoped memory for tpu_custom_call.1']
    #allocation7 [shape = 'u8[8192]{0}', space=vmem, size = 0x2000, scoped, tag = 'input window, operand 2, single buffered']
    #allocation8 [shape = 's32[1]{0}', space=sflag, size = 0x4, scoped, tag = 'scoped memory for tpu_custom_call.1']
    #allocation9 [shape = 'u8[32768]{0}', space=vmem, size = 0x8000, scoped, tag = 'input window, operand 4, single buffered']
    #allocation10 [shape = 'u8[32768]{0}', space=vmem, size = 0x8000, scoped, tag = 'output window, operand 0, single buffered']
    #allocation11 [shape = 'u8[8192]{0}', space=vmem, size = 0x2000, scoped, tag = 'output window, operand 1, single buffered']
    #allocation12 [shape = 's32[1]{0}', space=sflag, size = 0x4, scoped, tag = 'scoped memory for tpu_custom_call.1']
    #allocation13 [shape = 'u8[8192]{0}', space=vmem, size = 0x2000, scoped, tag = 'output window, operand 2, single buffered']
    %16 = vsyncpa [#allocation5], 0
    %17 = vsyncpa [#allocation8], 0
    %18 = vsyncpa [#allocation6], 0
    %19 = vsyncpa [#allocation12], 0
    // Predicated region
    $region2: #{tpu_custom_call.1} parent=1 // pred_check
      _
    $region3: #{tpu_custom_call.1} parent=1 // pred_check_branch
      %21 = sbr.rel (0) target = $region5
    $region4: #{tpu_custom_call.1} parent=1 // pred_region
      _
    $region5: #{tpu_custom_call.1} parent=1 // pred_fallthru
      _
    // Predicated region
    $region6: #{tpu_custom_call.1} parent=1 // pred_check
      _
    $region7: #{tpu_custom_call.1} parent=1 // pred_check_branch
      %23 = sbr.rel (0) target = $region9
    $region8: #{tpu_custom_call.1} parent=1 // pred_region
      %25 = vsyncadd [#allocation5], 0
      %s26 = sshll.u32 %s1, 4
      %s27 = int_to_ptr.hbm [resolvable:$true] %s26
      %s28 = sshll.u32 [#allocation4], 4
      %s29 = int_to_ptr.vmem [resolvable:$true] %s28
      %34 = dma.hbm_to_vmem [thread:$0]  %s27, 256, %s29, [#allocation5], 128, 128, 8
    $region9: #{tpu_custom_call.1} parent=1 // pred_fallthru
      _
    // Predicated region
    $region10: #{tpu_custom_call.1} parent=1 // pred_check
      _
    $region11: #{tpu_custom_call.1} parent=1 // pred_check_branch
      %36 = sbr.rel (0) target = $region13
    $region12: #{tpu_custom_call.1} parent=1 // pred_region
      %38 = vsyncadd [#allocation8], 0
      %s39 = sshll.u32 %s2, 4
      %s40 = int_to_ptr.hbm [resolvable:$true] %s39
      %s41 = sshll.u32 [#allocation7], 4
      %s42 = int_to_ptr.vmem [resolvable:$true] %s41
      %47 = dma.hbm_to_vmem [thread:$0]  %s40, 256, %s42, [#allocation8], 128, 128, 8
    $region13: #{tpu_custom_call.1} parent=1 // pred_fallthru
      _
    // Predicated region
    $region14: #{tpu_custom_call.1} parent=1 // pred_check
      _
    $region15: #{tpu_custom_call.1} parent=1 // pred_check_branch
      %49 = sbr.rel (0) target = $region17
    $region16: #{tpu_custom_call.1} parent=1 // pred_region
      _
    $region17: #{tpu_custom_call.1} parent=1 // pred_fallthru
      _
    // Predicated region
    $region18: #{tpu_custom_call.1} parent=1 // pred_check
      _
    $region19: #{tpu_custom_call.1} parent=1 // pred_check_branch
      %51 = sbr.rel (0) target = $region21
    $region20: #{tpu_custom_call.1} parent=1 // pred_region
      %53 = vsyncadd [#allocation8], 0
      %s54 = sshll.u32 %s4, 4
      %s55 = int_to_ptr.hbm [resolvable:$true] %s54
      %s56 = sshll.u32 [#allocation9], 4
      %s57 = int_to_ptr.vmem [resolvable:$true] %s56
      %62 = dma.hbm_to_vmem [thread:$0]  %s55, 1024, %s57, [#allocation8], 128, 128, 8
    $region21: #{tpu_custom_call.1} parent=1 // pred_fallthru
      _
    // Predicated region
    $region22: #{tpu_custom_call.1} parent=1 // pred_check
      _
    $region23: #{tpu_custom_call.1} parent=1 // pred_check_branch
      %64 = sbr.rel (0) target = $region25
    $region24: #{tpu_custom_call.1} parent=1 // pred_region
      _
    $region25: #{tpu_custom_call.1} parent=1 // pred_fallthru
      _
    // Predicated region
    $region26: #{tpu_custom_call.1} parent=1 // pred_check
      _
    $region27: #{tpu_custom_call.1} parent=1 // pred_check_branch
      %66 = sbr.rel (0) target = $region29
    $region28: #{tpu_custom_call.1} parent=1 // pred_region
      _
    $region29: #{tpu_custom_call.1} parent=1 // pred_fallthru
      _
    // Predicated region
    $region30: #{tpu_custom_call.1} parent=1 // pred_check
      _
    $region31: #{tpu_custom_call.1} parent=1 // pred_check_branch
      %68 = sbr.rel (0) target = $region33
    $region32: #{tpu_custom_call.1} parent=1 // pred_region
      _
    $region33: #{tpu_custom_call.1} parent=1 // pred_fallthru
      _
    // Predicated region
    $region34: #{tpu_custom_call.1} parent=1 // pred_check
      _
    $region35: #{tpu_custom_call.1} parent=1 // pred_check_branch
      %70 = sbr.rel (0) target = $region37
    $region36: #{tpu_custom_call.1} parent=1 // pred_region
      %72 = dma.done [#allocation5], 256
    $region37: #{tpu_custom_call.1} parent=1 // pred_fallthru
      _
    // Predicated region
    $region38: #{tpu_custom_call.1} parent=1 // pred_check
      _
    $region39: #{tpu_custom_call.1} parent=1 // pred_check_branch
      %74 = sbr.rel (0) target = $region41
    $region40: #{tpu_custom_call.1} parent=1 // pred_region
      %76 = dma.done [#allocation8], 256
    $region41: #{tpu_custom_call.1} parent=1 // pred_fallthru
      _
    // Predicated region
    $region42: #{tpu_custom_call.1} parent=1 // pred_check
      _
    $region43: #{tpu_custom_call.1} parent=1 // pred_check_branch
      %78 = sbr.rel (0) target = $region45
    $region44: #{tpu_custom_call.1} parent=1 // pred_region
      %80 = dma.done [#allocation8], 1024
    $region45: #{tpu_custom_call.1} parent=1 // pred_fallthru
      _
    %v81 = vld [vmem:[%s0] sm:$0xff]
    %v82 = vld [vmem:[%s0 + $0x8] sm:$0xff]
    %v83 = vld [vmem:[%s0 + $0x10] sm:$0xff]
    %v84 = vld [vmem:[%s0 + $0x18] sm:$0xff]
    %v85 = vld [vmem:[%s0 + $0x20] sm:$0xff]
    %v86 = vld [vmem:[%s0 + $0x28] sm:$0xff]
    %v87 = vld [vmem:[%s0 + $0x30] sm:$0xff]
    %v88 = vld [vmem:[%s0 + $0x38] sm:$0xff]
    %v89 = vld [vmem:[%s3] sm:$0xff]
    %v90 = vld [vmem:[%s3 + $0x8] sm:$0xff]
    %v91 = vld [vmem:[%s3 + $0x10] sm:$0xff]
    %v92 = vld [vmem:[%s3 + $0x18] sm:$0xff]
    %v93 = vld [vmem:[%s5] sm:$0x1]
    %v95 = vperm.slane %v93, 0
    %vm97 = vcmask 261120
    %v99 = vsel %vm97, %v81, 0
    %v102 = vsel %vm97, %v82, 0
    %v105 = vsel %vm97, %v83, 0
    %v108 = vsel %vm97, %v84, 0
    %v111 = vsel %vm97, %v85, 0
    %v114 = vsel %vm97, %v86, 0
    %v117 = vsel %vm97, %v87, 0
    %v120 = vsel %vm97, %v88, 0
    %122 = vmatpush.msra.mxu0 0.0
    %123 = vmatpush.msra.mxu0 0.0
    %124 = vmatpush.msra.mxu0 0.0
    %125 = vmatpush.msra.mxu0 0.0
    %126 = vmatpush.msra.mxu0 0.0
    %127 = vmatpush.msra.mxu0 0.0
    %128 = vmatpush.msra.mxu0 0.0
    %129 = vmatpush.msra.mxu0 0.0
    %130 = vmatpush.msra.mxu0 0.0
    %131 = vmatpush.msra.mxu0 0.0
    %132 = vmatpush.msra.mxu0 0.0
    %133 = vmatpush.msra.mxu0 0.0
    %134 = vmatpush.msra.mxu0 %v92
    %135 = vmatpush.msra.mxu0 %v91
    %136 = vmatpush.msra.mxu0 %v90
    %137 = vmatpush.msra.mxu0 %v89
    %138 = vmatmul.f32.gmra.mxu0 %v99
    %v139 = vpop.f32.mrf.mxu0
    %v140 = vadd.f32 %v95, %v139
    %141 = vmatmul.f32.gmra.mxu0 %v102
    %v142 = vpop.f32.mrf.mxu0
    %v143 = vadd.f32 %v95, %v142
    %144 = vmatmul.f32.gmra.mxu0 %v105
    %v145 = vpop.f32.mrf.mxu0
    %v146 = vadd.f32 %v95, %v145
    %147 = vmatmul.f32.gmra.mxu0 %v108
    %v148 = vpop.f32.mrf.mxu0
    %v149 = vadd.f32 %v95, %v148
    %150 = vmatmul.f32.gmra.mxu0 %v111
    %v151 = vpop.f32.mrf.mxu0
    %v152 = vadd.f32 %v95, %v151
    %153 = vmatmul.f32.gmra.mxu0 %v114
    %v154 = vpop.f32.mrf.mxu0
    %v155 = vadd.f32 %v95, %v154
    %156 = vmatmul.f32.gmra.mxu0 %v117
    %v157 = vpop.f32.mrf.mxu0
    %v158 = vadd.f32 %v95, %v157
    %159 = vmatmul.f32.gmra.mxu0 %v120
    %v160 = vpop.f32.mrf.mxu0
    %v161 = vadd.f32 %v95, %v160
    %162 = vdwg.mxu0
    %163 = vst [vmem:[#allocation2] sm:$0xff] %v140
    %164 = vst [vmem:[#allocation2 + $0x8] sm:$0xff] %v143
    %165 = vst [vmem:[#allocation2 + $0x10] sm:$0xff] %v146
    %166 = vst [vmem:[#allocation2 + $0x18] sm:$0xff] %v149
    %167 = vst [vmem:[#allocation2 + $0x20] sm:$0xff] %v152
    %168 = vst [vmem:[#allocation2 + $0x28] sm:$0xff] %v155
    %169 = vst [vmem:[#allocation2 + $0x30] sm:$0xff] %v158
    %170 = vst [vmem:[#allocation2 + $0x38] sm:$0xff] %v161
    %v171 = vld [vmem:[#allocation9] sm:$0xff]
    %v172 = vld [vmem:[#allocation9 + $0x8] sm:$0xff]
    %v173 = vld [vmem:[#allocation9 + $0x10] sm:$0xff]
    %v174 = vld [vmem:[#allocation9 + $0x18] sm:$0xff]
    %v175 = vld [vmem:[#allocation4] sm:$0xff]
    %v176 = vld [vmem:[#allocation7] sm:$0xff]
    %v177 = vld [vmem:[#allocation2] sm:$0xff]
    %v179 = vsel %vm97, %v175, 0
    %181 = vmatpush.msra.mxu0 0.0
    %182 = vmatpush.msra.mxu0 0.0
    %183 = vmatpush.msra.mxu0 0.0
    %184 = vmatpush.msra.mxu0 0.0
    %185 = vmatpush.msra.mxu0 0.0
    %186 = vmatpush.msra.mxu0 0.0
    %187 = vmatpush.msra.mxu0 0.0
    %188 = vmatpush.msra.mxu0 0.0
    %189 = vmatpush.msra.mxu0 0.0
    %190 = vmatpush.msra.mxu0 0.0
    %191 = vmatpush.msra.mxu0 0.0
    %192 = vmatpush.msra.mxu0 0.0
    %193 = vmatpush.msra.mxu0 %v174
    %194 = vmatpush.msra.mxu0 %v173
    %195 = vmatpush.msra.mxu0 %v172
    %196 = vmatpush.msra.mxu0 %v171
    %197 = vmatmul.f32.gmra.mxu0 %v179
    %v198 = vpop.f32.mrf.mxu0
    %v199 = vadd.f32 0.0, %v198
    %200 = vdwg.mxu0
    %v201 = vadd.f32 %v177, %v199
    %v202 = vxor.u32 %v201, 2147483648
    %v203 = vmul.f32 %v202, 1.442695
    %v204 = vpow.pop %v203
    %v205 = vadd.f32 %v204, 1.0
    %v206 = vrcp.pop %v205
    %v207 = vmul.f32 %v205, %v206
    %v208 = vsub.f32 1.0, %v207
    %v209 = vmul.f32 %v206, %v208
    %v210 = vadd.f32 %v206, %v209
    %vm211 = vweird.f32 %v205
    %vm212 = vweird.f32 %v206
    %vm213 = vmor %vm211, %vm212
    %v214 = vsel %vm213, %v206, %v210
    %v215 = vand.u32 2147483647, %v205
    %vm216 = vcmp.eq.f32.partialorder %v215, 8.507059e+37
    %v217 = vand.u32 %v205, 2147483648
    %v218 = vor.u32 1.1754944e-38, %v217
    %v219 = vsel %vm216, %v218, %v214
    %v220 = vmul.f32 1.0, %v219
    %v221 = vtanh.pop %v201
    %223 = vrot.lane.b32.xlu0 %v176, 32
    %v224 = vpop.permute.xlu0 %223
    %v226 = vmul.f32 %v220, %v224
    %228 = vrot.lane.b32.xlu0 %v221, 64
    %v229 = vpop.permute.xlu0 %228
    %v231 = vmul.f32 %v220, %v229
    %233 = vrot.lane.b32.xlu0 %v231, 32
    %v234 = vpop.permute.xlu0 %233
    %v236 = vadd.f32 %v226, %v234
    %v237 = vtanh.pop %v236
    %239 = vrot.lane.b32.xlu0 %v237, 64
    %v240 = vpop.permute.xlu0 %239
    %v242 = vmul.f32 %v220, %v240
    %244 = vrot.lane.b32.xlu0 %v242, 32
    %v245 = vpop.permute.xlu0 %244
    %247 = vst.msk [vmem:[#allocation3] sm:$0xff] %vm97, %v245
    %s248 = scalar_lea.vmem [#allocation2], 8
    %v249 = vld [vmem:[%s248] sm:$0xff]
    %v250 = vsel %vm97, %v245, 0
    %252 = vmatpush.msra.mxu0 0.0
    %253 = vmatpush.msra.mxu0 0.0
    %254 = vmatpush.msra.mxu0 0.0
    %255 = vmatpush.msra.mxu0 0.0
    %256 = vmatpush.msra.mxu0 0.0
    %257 = vmatpush.msra.mxu0 0.0
    %258 = vmatpush.msra.mxu0 0.0
    %259 = vmatpush.msra.mxu0 0.0
    %260 = vmatpush.msra.mxu0 0.0
    %261 = vmatpush.msra.mxu0 0.0
    %262 = vmatpush.msra.mxu0 0.0
    %263 = vmatpush.msra.mxu0 0.0
    %264 = vmatpush.msra.mxu0 %v174
    %265 = vmatpush.msra.mxu0 %v173
    %266 = vmatpush.msra.mxu0 %v172
    %267 = vmatpush.msra.mxu0 %v171
    %268 = vmatmul.f32.gmra.mxu0 %v250
    %v269 = vpop.f32.mrf.mxu0
    %v270 = vadd.f32 0.0, %v269
    %271 = vdwg.mxu0
    %v272 = vadd.f32 %v249, %v270
    %v273 = vxor.u32 %v272, 2147483648
    %v274 = vmul.f32 %v273, 1.442695
    %v275 = vpow.pop %v274
    %v276 = vadd.f32 %v275, 1.0
    %v277 = vrcp.pop %v276
    %v278 = vmul.f32 %v276, %v277
    %v279 = vsub.f32 1.0, %v278
    %v280 = vmul.f32 %v277, %v279
    %v281 = vadd.f32 %v277, %v280
    %vm282 = vweird.f32 %v276
    %vm283 = vweird.f32 %v277
    %vm284 = vmor %vm282, %vm283
    %v285 = vsel %vm284, %v277, %v281
    %v286 = vand.u32 2147483647, %v276
    %vm287 = vcmp.eq.f32.partialorder %v286, 8.507059e+37
    %v288 = vand.u32 %v276, 2147483648
    %v289 = vor.u32 1.1754944e-38, %v288
    %v290 = vsel %vm287, %v289, %v285
    %v291 = vmul.f32 1.0, %v290
    %v292 = vtanh.pop %v272
    %v293 = vmul.f32 %v291, %v236
    %295 = vrot.lane.b32.xlu0 %v292, 64
    %v296 = vpop.permute.xlu0 %295
    %v298 = vmul.f32 %v291, %v296
    %300 = vrot.lane.b32.xlu0 %v298, 32
    %v301 = vpop.permute.xlu0 %300
    %v303 = vadd.f32 %v293, %v301
    %v304 = vtanh.pop %v303
    %306 = vrot.lane.b32.xlu0 %v304, 64
    %v307 = vpop.permute.xlu0 %306
    %v309 = vmul.f32 %v291, %v307
    %311 = vrot.lane.b32.xlu0 %v309, 32
    %v312 = vpop.permute.xlu0 %311
    %s314 = scalar_lea.vmem [#allocation3], 8
    %315 = vst.msk [vmem:[%s314] sm:$0xff] %vm97, %v312
    %s316 = scalar_lea.vmem [#allocation2], 16
    %v317 = vld [vmem:[%s316] sm:$0xff]
    %v318 = vsel %vm97, %v312, 0
    %320 = vmatpush.msra.mxu0 0.0
    %321 = vmatpush.msra.mxu0 0.0
    %322 = vmatpush.msra.mxu0 0.0
    %323 = vmatpush.msra.mxu0 0.0
    %324 = vmatpush.msra.mxu0 0.0
    %325 = vmatpush.msra.mxu0 0.0
    %326 = vmatpush.msra.mxu0 0.0
    %327 = vmatpush.msra.mxu0 0.0
    %328 = vmatpush.msra.mxu0 0.0
    %329 = vmatpush.msra.mxu0 0.0
    %330 = vmatpush.msra.mxu0 0.0
    %331 = vmatpush.msra.mxu0 0.0
    %332 = vmatpush.msra.mxu0 %v174
    %333 = vmatpush.msra.mxu0 %v173
    %334 = vmatpush.msra.mxu0 %v172
    %335 = vmatpush.msra.mxu0 %v171
    %336 = vmatmul.f32.gmra.mxu0 %v318
    %v337 = vpop.f32.mrf.mxu0
    %v338 = vadd.f32 0.0, %v337
    %339 = vdwg.mxu0
    %v340 = vadd.f32 %v317, %v338
    %v341 = vxor.u32 %v340, 2147483648
    %v342 = vmul.f32 %v341, 1.442695
    %v343 = vpow.pop %v342
    %v344 = vadd.f32 %v343, 1.0
    %v345 = vrcp.pop %v344
    %v346 = vmul.f32 %v344, %v345
    %v347 = vsub.f32 1.0, %v346
    %v348 = vmul.f32 %v345, %v347
    %v349 = vadd.f32 %v345, %v348
    %vm350 = vweird.f32 %v344
    %vm351 = vweird.f32 %v345
    %vm352 = vmor %vm350, %vm351
    %v353 = vsel %vm352, %v345, %v349
    %v354 = vand.u32 2147483647, %v344
    %vm355 = vcmp.eq.f32.partialorder %v354, 8.507059e+37
    %v356 = vand.u32 %v344, 2147483648
    %v357 = vor.u32 1.1754944e-38, %v356
    %v358 = vsel %vm355, %v357, %v353
    %v359 = vmul.f32 1.0, %v358
    %v360 = vtanh.pop %v340
    %v361 = vmul.f32 %v359, %v303
    %363 = vrot.lane.b32.xlu0 %v360, 64
    %v364 = vpop.permute.xlu0 %363
    %v366 = vmul.f32 %v359, %v364
    %368 = vrot.lane.b32.xlu0 %v366, 32
    %v369 = vpop.permute.xlu0 %368
    %v371 = vadd.f32 %v361, %v369
    %v372 = vtanh.pop %v371
    %374 = vrot.lane.b32.xlu0 %v372, 64
    %v375 = vpop.permute.xlu0 %374
    %v377 = vmul.f32 %v359, %v375
    %379 = vrot.lane.b32.xlu0 %v377, 32
    %v380 = vpop.permute.xlu0 %379
    %s382 = scalar_lea.vmem [#allocation3], 16
    %383 = vst.msk [vmem:[%s382] sm:$0xff] %vm97, %v380
    %s384 = scalar_lea.vmem [#allocation2], 24
    %v385 = vld [vmem:[%s384] sm:$0xff]
    %v386 = vsel %vm97, %v380, 0
    %388 = vmatpush.msra.mxu0 0.0
    %389 = vmatpush.msra.mxu0 0.0
    %390 = vmatpush.msra.mxu0 0.0
    %391 = vmatpush.msra.mxu0 0.0
    %392 = vmatpush.msra.mxu0 0.0
    %393 = vmatpush.msra.mxu0 0.0
    %394 = vmatpush.msra.mxu0 0.0
    %395 = vmatpush.msra.mxu0 0.0
    %396 = vmatpush.msra.mxu0 0.0
    %397 = vmatpush.msra.mxu0 0.0
    %398 = vmatpush.msra.mxu0 0.0
    %399 = vmatpush.msra.mxu0 0.0
    %400 = vmatpush.msra.mxu0 %v174
    %401 = vmatpush.msra.mxu0 %v173
    %402 = vmatpush.msra.mxu0 %v172
    %403 = vmatpush.msra.mxu0 %v171
    %404 = vmatmul.f32.gmra.mxu0 %v386
    %v405 = vpop.f32.mrf.mxu0
    %v406 = vadd.f32 0.0, %v405
    %407 = vdwg.mxu0
    %v408 = vadd.f32 %v385, %v406
    %v409 = vxor.u32 %v408, 2147483648
    %v410 = vmul.f32 %v409, 1.442695
    %v411 = vpow.pop %v410
    %v412 = vadd.f32 %v411, 1.0
    %v413 = vrcp.pop %v412
    %v414 = vmul.f32 %v412, %v413
    %v415 = vsub.f32 1.0, %v414
    %v416 = vmul.f32 %v413, %v415
    %v417 = vadd.f32 %v413, %v416
    %vm418 = vweird.f32 %v412
    %vm419 = vweird.f32 %v413
    %vm420 = vmor %vm418, %vm419
    %v421 = vsel %vm420, %v413, %v417
    %v422 = vand.u32 2147483647, %v412
    %vm423 = vcmp.eq.f32.partialorder %v422, 8.507059e+37
    %v424 = vand.u32 %v412, 2147483648
    %v425 = vor.u32 1.1754944e-38, %v424
    %v426 = vsel %vm423, %v425, %v421
    %v427 = vmul.f32 1.0, %v426
    %v428 = vtanh.pop %v408
    %v429 = vmul.f32 %v427, %v371
    %431 = vrot.lane.b32.xlu0 %v428, 64
    %v432 = vpop.permute.xlu0 %431
    %v434 = vmul.f32 %v427, %v432
    %436 = vrot.lane.b32.xlu0 %v434, 32
    %v437 = vpop.permute.xlu0 %436
    %v439 = vadd.f32 %v429, %v437
    %v440 = vtanh.pop %v439
    %442 = vrot.lane.b32.xlu0 %v440, 64
    %v443 = vpop.permute.xlu0 %442
    %v445 = vmul.f32 %v427, %v443
    %447 = vrot.lane.b32.xlu0 %v445, 32
    %v448 = vpop.permute.xlu0 %447
    %s450 = scalar_lea.vmem [#allocation3], 24
    %451 = vst.msk [vmem:[%s450] sm:$0xff] %vm97, %v448
    %s452 = scalar_lea.vmem [#allocation2], 32
    %v453 = vld [vmem:[%s452] sm:$0xff]
    %v454 = vsel %vm97, %v448, 0
    %456 = vmatpush.msra.mxu0 0.0
    %457 = vmatpush.msra.mxu0 0.0
    %458 = vmatpush.msra.mxu0 0.0
    %459 = vmatpush.msra.mxu0 0.0
    %460 = vmatpush.msra.mxu0 0.0
    %461 = vmatpush.msra.mxu0 0.0
    %462 = vmatpush.msra.mxu0 0.0
    %463 = vmatpush.msra.mxu0 0.0
    %464 = vmatpush.msra.mxu0 0.0
    %465 = vmatpush.msra.mxu0 0.0
    %466 = vmatpush.msra.mxu0 0.0
    %467 = vmatpush.msra.mxu0 0.0
    %468 = vmatpush.msra.mxu0 %v174
    %469 = vmatpush.msra.mxu0 %v173
    %470 = vmatpush.msra.mxu0 %v172
    %471 = vmatpush.msra.mxu0 %v171
    %472 = vmatmul.f32.gmra.mxu0 %v454
    %v473 = vpop.f32.mrf.mxu0
    %v474 = vadd.f32 0.0, %v473
    %475 = vdwg.mxu0
    %v476 = vadd.f32 %v453, %v474
    %v477 = vxor.u32 %v476, 2147483648
    %v478 = vmul.f32 %v477, 1.442695
    %v479 = vpow.pop %v478
    %v480 = vadd.f32 %v479, 1.0
    %v481 = vrcp.pop %v480
    %v482 = vmul.f32 %v480, %v481
    %v483 = vsub.f32 1.0, %v482
    %v484 = vmul.f32 %v481, %v483
    %v485 = vadd.f32 %v481, %v484
    %vm486 = vweird.f32 %v480
    %vm487 = vweird.f32 %v481
    %vm488 = vmor %vm486, %vm487
    %v489 = vsel %vm488, %v481, %v485
    %v490 = vand.u32 2147483647, %v480
    %vm491 = vcmp.eq.f32.partialorder %v490, 8.507059e+37
    %v492 = vand.u32 %v480, 2147483648
    %v493 = vor.u32 1.1754944e-38, %v492
    %v494 = vsel %vm491, %v493, %v489
    %v495 = vmul.f32 1.0, %v494
    %v496 = vtanh.pop %v476
    %v497 = vmul.f32 %v495, %v439
    %499 = vrot.lane.b32.xlu0 %v496, 64
    %v500 = vpop.permute.xlu0 %499
    %v502 = vmul.f32 %v495, %v500
    %504 = vrot.lane.b32.xlu0 %v502, 32
    %v505 = vpop.permute.xlu0 %504
    %v507 = vadd.f32 %v497, %v505
    %v508 = vtanh.pop %v507
    %510 = vrot.lane.b32.xlu0 %v508, 64
    %v511 = vpop.permute.xlu0 %510
    %v513 = vmul.f32 %v495, %v511
    %515 = vrot.lane.b32.xlu0 %v513, 32
    %v516 = vpop.permute.xlu0 %515
    %s518 = scalar_lea.vmem [#allocation3], 32
    %519 = vst.msk [vmem:[%s518] sm:$0xff] %vm97, %v516
    %s520 = scalar_lea.vmem [#allocation2], 40
    %v521 = vld [vmem:[%s520] sm:$0xff]
    %v522 = vsel %vm97, %v516, 0
    %524 = vmatpush.msra.mxu0 0.0
    %525 = vmatpush.msra.mxu0 0.0
    %526 = vmatpush.msra.mxu0 0.0
    %527 = vmatpush.msra.mxu0 0.0
    %528 = vmatpush.msra.mxu0 0.0
    %529 = vmatpush.msra.mxu0 0.0
    %530 = vmatpush.msra.mxu0 0.0
    %531 = vmatpush.msra.mxu0 0.0
    %532 = vmatpush.msra.mxu0 0.0
    %533 = vmatpush.msra.mxu0 0.0
    %534 = vmatpush.msra.mxu0 0.0
    %535 = vmatpush.msra.mxu0 0.0
    %536 = vmatpush.msra.mxu0 %v174
    %537 = vmatpush.msra.mxu0 %v173
    %538 = vmatpush.msra.mxu0 %v172
    %539 = vmatpush.msra.mxu0 %v171
    %540 = vmatmul.f32.gmra.mxu0 %v522
    %v541 = vpop.f32.mrf.mxu0
    %v542 = vadd.f32 0.0, %v541
    %543 = vdwg.mxu0
    %v544 = vadd.f32 %v521, %v542
    %v545 = vxor.u32 %v544, 2147483648
    %v546 = vmul.f32 %v545, 1.442695
    %v547 = vpow.pop %v546
    %v548 = vadd.f32 %v547, 1.0
    %v549 = vrcp.pop %v548
    %v550 = vmul.f32 %v548, %v549
    %v551 = vsub.f32 1.0, %v550
    %v552 = vmul.f32 %v549, %v551
    %v553 = vadd.f32 %v549, %v552
    %vm554 = vweird.f32 %v548
    %vm555 = vweird.f32 %v549
    %vm556 = vmor %vm554, %vm555
    %v557 = vsel %vm556, %v549, %v553
    %v558 = vand.u32 2147483647, %v548
    %vm559 = vcmp.eq.f32.partialorder %v558, 8.507059e+37
    %v560 = vand.u32 %v548, 2147483648
    %v561 = vor.u32 1.1754944e-38, %v560
    %v562 = vsel %vm559, %v561, %v557
    %v563 = vmul.f32 1.0, %v562
    %v564 = vtanh.pop %v544
    %v565 = vmul.f32 %v563, %v507
    %567 = vrot.lane.b32.xlu0 %v564, 64
    %v568 = vpop.permute.xlu0 %567
    %v570 = vmul.f32 %v563, %v568
    %572 = vrot.lane.b32.xlu0 %v570, 32
    %v573 = vpop.permute.xlu0 %572
    %v575 = vadd.f32 %v565, %v573
    %v576 = vtanh.pop %v575
    %578 = vrot.lane.b32.xlu0 %v576, 64
    %v579 = vpop.permute.xlu0 %578
    %v581 = vmul.f32 %v563, %v579
    %583 = vrot.lane.b32.xlu0 %v581, 32
    %v584 = vpop.permute.xlu0 %583
    %s586 = scalar_lea.vmem [#allocation3], 40
    %587 = vst.msk [vmem:[%s586] sm:$0xff] %vm97, %v584
    %s588 = scalar_lea.vmem [#allocation2], 48
    %v589 = vld [vmem:[%s588] sm:$0xff]
    %v590 = vsel %vm97, %v584, 0
    %592 = vmatpush.msra.mxu0 0.0
    %593 = vmatpush.msra.mxu0 0.0
    %594 = vmatpush.msra.mxu0 0.0
    %595 = vmatpush.msra.mxu0 0.0
    %596 = vmatpush.msra.mxu0 0.0
    %597 = vmatpush.msra.mxu0 0.0
    %598 = vmatpush.msra.mxu0 0.0
    %599 = vmatpush.msra.mxu0 0.0
    %600 = vmatpush.msra.mxu0 0.0
    %601 = vmatpush.msra.mxu0 0.0
    %602 = vmatpush.msra.mxu0 0.0
    %603 = vmatpush.msra.mxu0 0.0
    %604 = vmatpush.msra.mxu0 %v174
    %605 = vmatpush.msra.mxu0 %v173
    %606 = vmatpush.msra.mxu0 %v172
    %607 = vmatpush.msra.mxu0 %v171
    %608 = vmatmul.f32.gmra.mxu0 %v590
    %v609 = vpop.f32.mrf.mxu0
    %v610 = vadd.f32 0.0, %v609
    %611 = vdwg.mxu0
    %v612 = vadd.f32 %v589, %v610
    %v613 = vxor.u32 %v612, 2147483648
    %v614 = vmul.f32 %v613, 1.442695
    %v615 = vpow.pop %v614
    %v616 = vadd.f32 %v615, 1.0
    %v617 = vrcp.pop %v616
    %v618 = vmul.f32 %v616, %v617
    %v619 = vsub.f32 1.0, %v618
    %v620 = vmul.f32 %v617, %v619
    %v621 = vadd.f32 %v617, %v620
    %vm622 = vweird.f32 %v616
    %vm623 = vweird.f32 %v617
    %vm624 = vmor %vm622, %vm623
    %v625 = vsel %vm624, %v617, %v621
    %v626 = vand.u32 2147483647, %v616
    %vm627 = vcmp.eq.f32.partialorder %v626, 8.507059e+37
    %v628 = vand.u32 %v616, 2147483648
    %v629 = vor.u32 1.1754944e-38, %v628
    %v630 = vsel %vm627, %v629, %v625
    %v631 = vmul.f32 1.0, %v630
    %v632 = vtanh.pop %v612
    %v633 = vmul.f32 %v631, %v575
    %635 = vrot.lane.b32.xlu0 %v632, 64
    %v636 = vpop.permute.xlu0 %635
    %v638 = vmul.f32 %v631, %v636
    %640 = vrot.lane.b32.xlu0 %v638, 32
    %v641 = vpop.permute.xlu0 %640
    %v643 = vadd.f32 %v633, %v641
    %v644 = vtanh.pop %v643
    %646 = vrot.lane.b32.xlu0 %v644, 64
    %v647 = vpop.permute.xlu0 %646
    %v649 = vmul.f32 %v631, %v647
    %651 = vrot.lane.b32.xlu0 %v649, 32
    %v652 = vpop.permute.xlu0 %651
    %s654 = scalar_lea.vmem [#allocation3], 48
    %655 = vst.msk [vmem:[%s654] sm:$0xff] %vm97, %v652
    %s656 = scalar_lea.vmem [#allocation2], 56
    %v657 = vld [vmem:[%s656] sm:$0xff]
    %v658 = vsel %vm97, %v652, 0
    %660 = vmatpush.msra.mxu0 0.0
    %661 = vmatpush.msra.mxu0 0.0
    %662 = vmatpush.msra.mxu0 0.0
    %663 = vmatpush.msra.mxu0 0.0
    %664 = vmatpush.msra.mxu0 0.0
    %665 = vmatpush.msra.mxu0 0.0
    %666 = vmatpush.msra.mxu0 0.0
    %667 = vmatpush.msra.mxu0 0.0
    %668 = vmatpush.msra.mxu0 0.0
    %669 = vmatpush.msra.mxu0 0.0
    %670 = vmatpush.msra.mxu0 0.0
    %671 = vmatpush.msra.mxu0 0.0
    %672 = vmatpush.msra.mxu0 %v174
    %673 = vmatpush.msra.mxu0 %v173
    %674 = vmatpush.msra.mxu0 %v172
    %675 = vmatpush.msra.mxu0 %v171
    %676 = vmatmul.f32.gmra.mxu0 %v658
    %v677 = vpop.f32.mrf.mxu0
    %v678 = vadd.f32 0.0, %v677
    %679 = vdwg.mxu0
    %v680 = vadd.f32 %v657, %v678
    %v681 = vxor.u32 %v680, 2147483648
    %v682 = vmul.f32 %v681, 1.442695
    %v683 = vpow.pop %v682
    %v684 = vadd.f32 %v683, 1.0
    %v685 = vrcp.pop %v684
    %v686 = vmul.f32 %v684, %v685
    %v687 = vsub.f32 1.0, %v686
    %v688 = vmul.f32 %v685, %v687
    %v689 = vadd.f32 %v685, %v688
    %vm690 = vweird.f32 %v684
    %vm691 = vweird.f32 %v685
    %vm692 = vmor %vm690, %vm691
    %v693 = vsel %vm692, %v685, %v689
    %v694 = vand.u32 2147483647, %v684
    %vm695 = vcmp.eq.f32.partialorder %v694, 8.507059e+37
    %v696 = vand.u32 %v684, 2147483648
    %v697 = vor.u32 1.1754944e-38, %v696
    %v698 = vsel %vm695, %v697, %v693
    %v699 = vmul.f32 1.0, %v698
    %v700 = vtanh.pop %v680
    %v701 = vmul.f32 %v699, %v643
    %703 = vrot.lane.b32.xlu0 %v700, 64
    %v704 = vpop.permute.xlu0 %703
    %v706 = vmul.f32 %v699, %v704
    %708 = vrot.lane.b32.xlu0 %v706, 32
    %v709 = vpop.permute.xlu0 %708
    %v711 = vadd.f32 %v701, %v709
    %v712 = vtanh.pop %v711
    %714 = vrot.lane.b32.xlu0 %v712, 64
    %v715 = vpop.permute.xlu0 %714
    %v717 = vmul.f32 %v699, %v715
    %719 = vrot.lane.b32.xlu0 %v717, 32
    %v720 = vpop.permute.xlu0 %719
    %s722 = scalar_lea.vmem [#allocation3], 56
    %723 = vst.msk [vmem:[%s722] sm:$0xff] %vm97, %v720
    %724 = vst.msk [vmem:[#allocation11] sm:$0xff] %vm97, %v720
    %726 = vrot.lane.b32.xlu0 %v711, 96
    %v727 = vpop.permute.xlu0 %726
    %729 = vst.msk [vmem:[#allocation13] sm:$0xff] %vm97, %v727
    %v730 = vld [vmem:[#allocation3] sm:$0xff]
    %v731 = vld [vmem:[#allocation3 + $0x8] sm:$0xff]
    %v732 = vld [vmem:[#allocation3 + $0x10] sm:$0xff]
    %v733 = vld [vmem:[#allocation3 + $0x18] sm:$0xff]
    %v734 = vld [vmem:[#allocation3 + $0x20] sm:$0xff]
    %v735 = vld [vmem:[#allocation3 + $0x28] sm:$0xff]
    %v736 = vld [vmem:[#allocation3 + $0x30] sm:$0xff]
    %v737 = vld [vmem:[#allocation3 + $0x38] sm:$0xff]
    %s738 = scalar_lea.vmem %s3, 32
    %v739 = vld [vmem:[%s738] sm:$0xff]
    %v740 = vld [vmem:[%s738 + $0x8] sm:$0xff]
    %v741 = vld [vmem:[%s738 + $0x10] sm:$0xff]
    %v742 = vld [vmem:[%s738 + $0x18] sm:$0xff]
    %s743 = scalar_lea.vmem %s5, 1
    %v744 = vld [vmem:[%s743] sm:$0x1]
    %v746 = vperm.slane %v744, 0
    %v749 = vsel %vm97, %v730, 0
    %v752 = vsel %vm97, %v731, 0
    %v755 = vsel %vm97, %v732, 0
    %v758 = vsel %vm97, %v733, 0
    %v761 = vsel %vm97, %v734, 0
    %v764 = vsel %vm97, %v735, 0
    %v767 = vsel %vm97, %v736, 0
    %v770 = vsel %vm97, %v737, 0
    %772 = vmatpush.msra.mxu0 0.0
    %773 = vmatpush.msra.mxu0 0.0
    %774 = vmatpush.msra.mxu0 0.0
    %775 = vmatpush.msra.mxu0 0.0
    %776 = vmatpush.msra.mxu0 0.0
    %777 = vmatpush.msra.mxu0 0.0
    %778 = vmatpush.msra.mxu0 0.0
    %779 = vmatpush.msra.mxu0 0.0
    %780 = vmatpush.msra.mxu0 0.0
    %781 = vmatpush.msra.mxu0 0.0
    %782 = vmatpush.msra.mxu0 0.0
    %783 = vmatpush.msra.mxu0 0.0
    %784 = vmatpush.msra.mxu0 %v742
    %785 = vmatpush.msra.mxu0 %v741
    %786 = vmatpush.msra.mxu0 %v740
    %787 = vmatpush.msra.mxu0 %v739
    %788 = vmatmul.f32.gmra.mxu0 %v749
    %v789 = vpop.f32.mrf.mxu0
    %v790 = vadd.f32 %v746, %v789
    %791 = vmatmul.f32.gmra.mxu0 %v752
    %v792 = vpop.f32.mrf.mxu0
    %v793 = vadd.f32 %v746, %v792
    %794 = vmatmul.f32.gmra.mxu0 %v755
    %v795 = vpop.f32.mrf.mxu0
    %v796 = vadd.f32 %v746, %v795
    %797 = vmatmul.f32.gmra.mxu0 %v758
    %v798 = vpop.f32.mrf.mxu0
    %v799 = vadd.f32 %v746, %v798
    %800 = vmatmul.f32.gmra.mxu0 %v761
    %v801 = vpop.f32.mrf.mxu0
    %v802 = vadd.f32 %v746, %v801
    %803 = vmatmul.f32.gmra.mxu0 %v764
    %v804 = vpop.f32.mrf.mxu0
    %v805 = vadd.f32 %v746, %v804
    %806 = vmatmul.f32.gmra.mxu0 %v767
    %v807 = vpop.f32.mrf.mxu0
    %v808 = vadd.f32 %v746, %v807
    %809 = vmatmul.f32.gmra.mxu0 %v770
    %v810 = vpop.f32.mrf.mxu0
    %v811 = vadd.f32 %v746, %v810
    %812 = vdwg.mxu0
    %813 = vst [vmem:[#allocation2] sm:$0xff] %v790
    %814 = vst [vmem:[#allocation2 + $0x8] sm:$0xff] %v793
    %815 = vst [vmem:[#allocation2 + $0x10] sm:$0xff] %v796
    %816 = vst [vmem:[#allocation2 + $0x18] sm:$0xff] %v799
    %817 = vst [vmem:[#allocation2 + $0x20] sm:$0xff] %v802
    %818 = vst [vmem:[#allocation2 + $0x28] sm:$0xff] %v805
    %819 = vst [vmem:[#allocation2 + $0x30] sm:$0xff] %v808
    %820 = vst [vmem:[#allocation2 + $0x38] sm:$0xff] %v811
    %s821 = scalar_lea.vmem [#allocation9], 32
    %v822 = vld [vmem:[%s821] sm:$0xff]
    %v823 = vld [vmem:[%s821 + $0x8] sm:$0xff]
    %v824 = vld [vmem:[%s821 + $0x10] sm:$0xff]
    %v825 = vld [vmem:[%s821 + $0x18] sm:$0xff]
    %s826 = scalar_lea.vmem [#allocation4], 8
    %v827 = vld [vmem:[%s826] sm:$0xff]
    %s828 = scalar_lea.vmem [#allocation7], 8
    %v829 = vld [vmem:[%s828] sm:$0xff]
    %v830 = vld [vmem:[#allocation2] sm:$0xff]
    %v832 = vsel %vm97, %v827, 0
    %834 = vmatpush.msra.mxu0 0.0
    %835 = vmatpush.msra.mxu0 0.0
    %836 = vmatpush.msra.mxu0 0.0
    %837 = vmatpush.msra.mxu0 0.0
    %838 = vmatpush.msra.mxu0 0.0
    %839 = vmatpush.msra.mxu0 0.0
    %840 = vmatpush.msra.mxu0 0.0
    %841 = vmatpush.msra.mxu0 0.0
    %842 = vmatpush.msra.mxu0 0.0
    %843 = vmatpush.msra.mxu0 0.0
    %844 = vmatpush.msra.mxu0 0.0
    %845 = vmatpush.msra.mxu0 0.0
    %846 = vmatpush.msra.mxu0 %v825
    %847 = vmatpush.msra.mxu0 %v824
    %848 = vmatpush.msra.mxu0 %v823
    %849 = vmatpush.msra.mxu0 %v822
    %850 = vmatmul.f32.gmra.mxu0 %v832
    %v851 = vpop.f32.mrf.mxu0
    %v852 = vadd.f32 0.0, %v851
    %853 = vdwg.mxu0
    %v854 = vadd.f32 %v830, %v852
    %v855 = vxor.u32 %v854, 2147483648
    %v856 = vmul.f32 %v855, 1.442695
    %v857 = vpow.pop %v856
    %v858 = vadd.f32 %v857, 1.0
    %v859 = vrcp.pop %v858
    %v860 = vmul.f32 %v858, %v859
    %v861 = vsub.f32 1.0, %v860
    %v862 = vmul.f32 %v859, %v861
    %v863 = vadd.f32 %v859, %v862
    %vm864 = vweird.f32 %v858
    %vm865 = vweird.f32 %v859
    %vm866 = vmor %vm864, %vm865
    %v867 = vsel %vm866, %v859, %v863
    %v868 = vand.u32 2147483647, %v858
    %vm869 = vcmp.eq.f32.partialorder %v868, 8.507059e+37
    %v870 = vand.u32 %v858, 2147483648
    %v871 = vor.u32 1.1754944e-38, %v870
    %v872 = vsel %vm869, %v871, %v867
    %v873 = vmul.f32 1.0, %v872
    %v874 = vtanh.pop %v854
    %876 = vrot.lane.b32.xlu0 %v829, 32
    %v877 = vpop.permute.xlu0 %876
    %v879 = vmul.f32 %v873, %v877
    %881 = vrot.lane.b32.xlu0 %v874, 64
    %v882 = vpop.permute.xlu0 %881
    %v884 = vmul.f32 %v873, %v882
    %886 = vrot.lane.b32.xlu0 %v884, 32
    %v887 = vpop.permute.xlu0 %886
    %v889 = vadd.f32 %v879, %v887
    %v890 = vtanh.pop %v889
    %892 = vrot.lane.b32.xlu0 %v890, 64
    %v893 = vpop.permute.xlu0 %892
    %v895 = vmul.f32 %v873, %v893
    %897 = vrot.lane.b32.xlu0 %v895, 32
    %v898 = vpop.permute.xlu0 %897
    %900 = vst.msk [vmem:[#allocation3] sm:$0xff] %vm97, %v898
    %v901 = vld [vmem:[%s248] sm:$0xff]
    %v902 = vsel %vm97, %v898, 0
    %904 = vmatpush.msra.mxu0 0.0
    %905 = vmatpush.msra.mxu0 0.0
    %906 = vmatpush.msra.mxu0 0.0
    %907 = vmatpush.msra.mxu0 0.0
    %908 = vmatpush.msra.mxu0 0.0
    %909 = vmatpush.msra.mxu0 0.0
    %910 = vmatpush.msra.mxu0 0.0
    %911 = vmatpush.msra.mxu0 0.0
    %912 = vmatpush.msra.mxu0 0.0
    %913 = vmatpush.msra.mxu0 0.0
    %914 = vmatpush.msra.mxu0 0.0
    %915 = vmatpush.msra.mxu0 0.0
    %916 = vmatpush.msra.mxu0 %v825
    %917 = vmatpush.msra.mxu0 %v824
    %918 = vmatpush.msra.mxu0 %v823
    %919 = vmatpush.msra.mxu0 %v822
    %920 = vmatmul.f32.gmra.mxu0 %v902
    %v921 = vpop.f32.mrf.mxu0
    %v922 = vadd.f32 0.0, %v921
    %923 = vdwg.mxu0
    %v924 = vadd.f32 %v901, %v922
    %v925 = vxor.u32 %v924, 2147483648
    %v926 = vmul.f32 %v925, 1.442695
    %v927 = vpow.pop %v926
    %v928 = vadd.f32 %v927, 1.0
    %v929 = vrcp.pop %v928
    %v930 = vmul.f32 %v928, %v929
    %v931 = vsub.f32 1.0, %v930
    %v932 = vmul.f32 %v929, %v931
    %v933 = vadd.f32 %v929, %v932
    %vm934 = vweird.f32 %v928
    %vm935 = vweird.f32 %v929
    %vm936 = vmor %vm934, %vm935
    %v937 = vsel %vm936, %v929, %v933
    %v938 = vand.u32 2147483647, %v928
    %vm939 = vcmp.eq.f32.partialorder %v938, 8.507059e+37
    %v940 = vand.u32 %v928, 2147483648
    %v941 = vor.u32 1.1754944e-38, %v940
    %v942 = vsel %vm939, %v941, %v937
    %v943 = vmul.f32 1.0, %v942
    %v944 = vtanh.pop %v924
    %v945 = vmul.f32 %v943, %v889
    %947 = vrot.lane.b32.xlu0 %v944, 64
    %v948 = vpop.permute.xlu0 %947
    %v950 = vmul.f32 %v943, %v948
    %952 = vrot.lane.b32.xlu0 %v950, 32
    %v953 = vpop.permute.xlu0 %952
    %v955 = vadd.f32 %v945, %v953
    %v956 = vtanh.pop %v955
    %958 = vrot.lane.b32.xlu0 %v956, 64
    %v959 = vpop.permute.xlu0 %958
    %v961 = vmul.f32 %v943, %v959
    %963 = vrot.lane.b32.xlu0 %v961, 32
    %v964 = vpop.permute.xlu0 %963
    %966 = vst.msk [vmem:[%s314] sm:$0xff] %vm97, %v964
    %v967 = vld [vmem:[%s316] sm:$0xff]
    %v968 = vsel %vm97, %v964, 0
    %970 = vmatpush.msra.mxu0 0.0
    %971 = vmatpush.msra.mxu0 0.0
    %972 = vmatpush.msra.mxu0 0.0
    %973 = vmatpush.msra.mxu0 0.0
    %974 = vmatpush.msra.mxu0 0.0
    %975 = vmatpush.msra.mxu0 0.0
    %976 = vmatpush.msra.mxu0 0.0
    %977 = vmatpush.msra.mxu0 0.0
    %978 = vmatpush.msra.mxu0 0.0
    %979 = vmatpush.msra.mxu0 0.0
    %980 = vmatpush.msra.mxu0 0.0
    %981 = vmatpush.msra.mxu0 0.0
    %982 = vmatpush.msra.mxu0 %v825
    %983 = vmatpush.msra.mxu0 %v824
    %984 = vmatpush.msra.mxu0 %v823
    %985 = vmatpush.msra.mxu0 %v822
    %986 = vmatmul.f32.gmra.mxu0 %v968
    %v987 = vpop.f32.mrf.mxu0
    %v988 = vadd.f32 0.0, %v987
    %989 = vdwg.mxu0
    %v990 = vadd.f32 %v967, %v988
    %v991 = vxor.u32 %v990, 2147483648
    %v992 = vmul.f32 %v991, 1.442695
    %v993 = vpow.pop %v992
    %v994 = vadd.f32 %v993, 1.0
    %v995 = vrcp.pop %v994
    %v996 = vmul.f32 %v994, %v995
    %v997 = vsub.f32 1.0, %v996
    %v998 = vmul.f32 %v995, %v997
    %v999 = vadd.f32 %v995, %v998
    %vm1000 = vweird.f32 %v994
    %vm1001 = vweird.f32 %v995
    %vm1002 = vmor %vm1000, %vm1001
    %v1003 = vsel %vm1002, %v995, %v999
    %v1004 = vand.u32 2147483647, %v994
    %vm1005 = vcmp.eq.f32.partialorder %v1004, 8.507059e+37
    %v1006 = vand.u32 %v994, 2147483648
    %v1007 = vor.u32 1.1754944e-38, %v1006
    %v1008 = vsel %vm1005, %v1007, %v1003
    %v1009 = vmul.f32 1.0, %v1008
    %v1010 = vtanh.pop %v990
    %v1011 = vmul.f32 %v1009, %v955
    %1013 = vrot.lane.b32.xlu0 %v1010, 64
    %v1014 = vpop.permute.xlu0 %1013
    %v1016 = vmul.f32 %v1009, %v1014
    %1018 = vrot.lane.b32.xlu0 %v1016, 32
    %v1019 = vpop.permute.xlu0 %1018
    %v1021 = vadd.f32 %v1011, %v1019
    %v1022 = vtanh.pop %v1021
    %1024 = vrot.lane.b32.xlu0 %v1022, 64
    %v1025 = vpop.permute.xlu0 %1024
    %v1027 = vmul.f32 %v1009, %v1025
    %1029 = vrot.lane.b32.xlu0 %v1027, 32
    %v1030 = vpop.permute.xlu0 %1029
    %1032 = vst.msk [vmem:[%s382] sm:$0xff] %vm97, %v1030
    %v1033 = vld [vmem:[%s384] sm:$0xff]
    %v1034 = vsel %vm97, %v1030, 0
    %1036 = vmatpush.msra.mxu0 0.0
    %1037 = vmatpush.msra.mxu0 0.0
    %1038 = vmatpush.msra.mxu0 0.0
    %1039 = vmatpush.msra.mxu0 0.0
    %1040 = vmatpush.msra.mxu0 0.0
    %1041 = vmatpush.msra.mxu0 0.0
    %1042 = vmatpush.msra.mxu0 0.0
    %1043 = vmatpush.msra.mxu0 0.0
    %1044 = vmatpush.msra.mxu0 0.0
    %1045 = vmatpush.msra.mxu0 0.0
    %1046 = vmatpush.msra.mxu0 0.0
    %1047 = vmatpush.msra.mxu0 0.0
    %1048 = vmatpush.msra.mxu0 %v825
    %1049 = vmatpush.msra.mxu0 %v824
    %1050 = vmatpush.msra.mxu0 %v823
    %1051 = vmatpush.msra.mxu0 %v822
    %1052 = vmatmul.f32.gmra.mxu0 %v1034
    %v1053 = vpop.f32.mrf.mxu0
    %v1054 = vadd.f32 0.0, %v1053
    %1055 = vdwg.mxu0
    %v1056 = vadd.f32 %v1033, %v1054
    %v1057 = vxor.u32 %v1056, 2147483648
    %v1058 = vmul.f32 %v1057, 1.442695
    %v1059 = vpow.pop %v1058
    %v1060 = vadd.f32 %v1059, 1.0
    %v1061 = vrcp.pop %v1060
    %v1062 = vmul.f32 %v1060, %v1061
    %v1063 = vsub.f32 1.0, %v1062
    %v1064 = vmul.f32 %v1061, %v1063
    %v1065 = vadd.f32 %v1061, %v1064
    %vm1066 = vweird.f32 %v1060
    %vm1067 = vweird.f32 %v1061
    %vm1068 = vmor %vm1066, %vm1067
    %v1069 = vsel %vm1068, %v1061, %v1065
    %v1070 = vand.u32 2147483647, %v1060
    %vm1071 = vcmp.eq.f32.partialorder %v1070, 8.507059e+37
    %v1072 = vand.u32 %v1060, 2147483648
    %v1073 = vor.u32 1.1754944e-38, %v1072
    %v1074 = vsel %vm1071, %v1073, %v1069
    %v1075 = vmul.f32 1.0, %v1074
    %v1076 = vtanh.pop %v1056
    %v1077 = vmul.f32 %v1075, %v1021
    %1079 = vrot.lane.b32.xlu0 %v1076, 64
    %v1080 = vpop.permute.xlu0 %1079
    %v1082 = vmul.f32 %v1075, %v1080
    %1084 = vrot.lane.b32.xlu0 %v1082, 32
    %v1085 = vpop.permute.xlu0 %1084
    %v1087 = vadd.f32 %v1077, %v1085
    %v1088 = vtanh.pop %v1087
    %1090 = vrot.lane.b32.xlu0 %v1088, 64
    %v1091 = vpop.permute.xlu0 %1090
    %v1093 = vmul.f32 %v1075, %v1091
    %1095 = vrot.lane.b32.xlu0 %v1093, 32
    %v1096 = vpop.permute.xlu0 %1095
    %1098 = vst.msk [vmem:[%s450] sm:$0xff] %vm97, %v1096
    %v1099 = vld [vmem:[%s452] sm:$0xff]
    %v1100 = vsel %vm97, %v1096, 0
    %1102 = vmatpush.msra.mxu0 0.0
    %1103 = vmatpush.msra.mxu0 0.0
    %1104 = vmatpush.msra.mxu0 0.0
    %1105 = vmatpush.msra.mxu0 0.0
    %1106 = vmatpush.msra.mxu0 0.0
    %1107 = vmatpush.msra.mxu0 0.0
    %1108 = vmatpush.msra.mxu0 0.0
    %1109 = vmatpush.msra.mxu0 0.0
    %1110 = vmatpush.msra.mxu0 0.0
    %1111 = vmatpush.msra.mxu0 0.0
    %1112 = vmatpush.msra.mxu0 0.0
    %1113 = vmatpush.msra.mxu0 0.0
    %1114 = vmatpush.msra.mxu0 %v825
    %1115 = vmatpush.msra.mxu0 %v824
    %1116 = vmatpush.msra.mxu0 %v823
    %1117 = vmatpush.msra.mxu0 %v822
    %1118 = vmatmul.f32.gmra.mxu0 %v1100
    %v1119 = vpop.f32.mrf.mxu0
    %v1120 = vadd.f32 0.0, %v1119
    %1121 = vdwg.mxu0
    %v1122 = vadd.f32 %v1099, %v1120
    %v1123 = vxor.u32 %v1122, 2147483648
    %v1124 = vmul.f32 %v1123, 1.442695
    %v1125 = vpow.pop %v1124
    %v1126 = vadd.f32 %v1125, 1.0
    %v1127 = vrcp.pop %v1126
    %v1128 = vmul.f32 %v1126, %v1127
    %v1129 = vsub.f32 1.0, %v1128
    %v1130 = vmul.f32 %v1127, %v1129
    %v1131 = vadd.f32 %v1127, %v1130
    %vm1132 = vweird.f32 %v1126
    %vm1133 = vweird.f32 %v1127
    %vm1134 = vmor %vm1132, %vm1133
    %v1135 = vsel %vm1134, %v1127, %v1131
    %v1136 = vand.u32 2147483647, %v1126
    %vm1137 = vcmp.eq.f32.partialorder %v1136, 8.507059e+37
    %v1138 = vand.u32 %v1126, 2147483648
    %v1139 = vor.u32 1.1754944e-38, %v1138
    %v1140 = vsel %vm1137, %v1139, %v1135
    %v1141 = vmul.f32 1.0, %v1140
    %v1142 = vtanh.pop %v1122
    %v1143 = vmul.f32 %v1141, %v1087
    %1145 = vrot.lane.b32.xlu0 %v1142, 64
    %v1146 = vpop.permute.xlu0 %1145
    %v1148 = vmul.f32 %v1141, %v1146
    %1150 = vrot.lane.b32.xlu0 %v1148, 32
    %v1151 = vpop.permute.xlu0 %1150
    %v1153 = vadd.f32 %v1143, %v1151
    %v1154 = vtanh.pop %v1153
    %1156 = vrot.lane.b32.xlu0 %v1154, 64
    %v1157 = vpop.permute.xlu0 %1156
    %v1159 = vmul.f32 %v1141, %v1157
    %1161 = vrot.lane.b32.xlu0 %v1159, 32
    %v1162 = vpop.permute.xlu0 %1161
    %1164 = vst.msk [vmem:[%s518] sm:$0xff] %vm97, %v1162
    %v1165 = vld [vmem:[%s520] sm:$0xff]
    %v1166 = vsel %vm97, %v1162, 0
    %1168 = vmatpush.msra.mxu0 0.0
    %1169 = vmatpush.msra.mxu0 0.0
    %1170 = vmatpush.msra.mxu0 0.0
    %1171 = vmatpush.msra.mxu0 0.0
    %1172 = vmatpush.msra.mxu0 0.0
    %1173 = vmatpush.msra.mxu0 0.0
    %1174 = vmatpush.msra.mxu0 0.0
    %1175 = vmatpush.msra.mxu0 0.0
    %1176 = vmatpush.msra.mxu0 0.0
    %1177 = vmatpush.msra.mxu0 0.0
    %1178 = vmatpush.msra.mxu0 0.0
    %1179 = vmatpush.msra.mxu0 0.0
    %1180 = vmatpush.msra.mxu0 %v825
    %1181 = vmatpush.msra.mxu0 %v824
    %1182 = vmatpush.msra.mxu0 %v823
    %1183 = vmatpush.msra.mxu0 %v822
    %1184 = vmatmul.f32.gmra.mxu0 %v1166
    %v1185 = vpop.f32.mrf.mxu0
    %v1186 = vadd.f32 0.0, %v1185
    %1187 = vdwg.mxu0
    %v1188 = vadd.f32 %v1165, %v1186
    %v1189 = vxor.u32 %v1188, 2147483648
    %v1190 = vmul.f32 %v1189, 1.442695
    %v1191 = vpow.pop %v1190
    %v1192 = vadd.f32 %v1191, 1.0
    %v1193 = vrcp.pop %v1192
    %v1194 = vmul.f32 %v1192, %v1193
    %v1195 = vsub.f32 1.0, %v1194
    %v1196 = vmul.f32 %v1193, %v1195
    %v1197 = vadd.f32 %v1193, %v1196
    %vm1198 = vweird.f32 %v1192
    %vm1199 = vweird.f32 %v1193
    %vm1200 = vmor %vm1198, %vm1199
    %v1201 = vsel %vm1200, %v1193, %v1197
    %v1202 = vand.u32 2147483647, %v1192
    %vm1203 = vcmp.eq.f32.partialorder %v1202, 8.507059e+37
    %v1204 = vand.u32 %v1192, 2147483648
    %v1205 = vor.u32 1.1754944e-38, %v1204
    %v1206 = vsel %vm1203, %v1205, %v1201
    %v1207 = vmul.f32 1.0, %v1206
    %v1208 = vtanh.pop %v1188
    %v1209 = vmul.f32 %v1207, %v1153
    %1211 = vrot.lane.b32.xlu0 %v1208, 64
    %v1212 = vpop.permute.xlu0 %1211
    %v1214 = vmul.f32 %v1207, %v1212
    %1216 = vrot.lane.b32.xlu0 %v1214, 32
    %v1217 = vpop.permute.xlu0 %1216
    %v1219 = vadd.f32 %v1209, %v1217
    %v1220 = vtanh.pop %v1219
    %1222 = vrot.lane.b32.xlu0 %v1220, 64
    %v1223 = vpop.permute.xlu0 %1222
    %v1225 = vmul.f32 %v1207, %v1223
    %1227 = vrot.lane.b32.xlu0 %v1225, 32
    %v1228 = vpop.permute.xlu0 %1227
    %1230 = vst.msk [vmem:[%s586] sm:$0xff] %vm97, %v1228
    %v1231 = vld [vmem:[%s588] sm:$0xff]
    %v1232 = vsel %vm97, %v1228, 0
    %1234 = vmatpush.msra.mxu0 0.0
    %1235 = vmatpush.msra.mxu0 0.0
    %1236 = vmatpush.msra.mxu0 0.0
    %1237 = vmatpush.msra.mxu0 0.0
    %1238 = vmatpush.msra.mxu0 0.0
    %1239 = vmatpush.msra.mxu0 0.0
    %1240 = vmatpush.msra.mxu0 0.0
    %1241 = vmatpush.msra.mxu0 0.0
    %1242 = vmatpush.msra.mxu0 0.0
    %1243 = vmatpush.msra.mxu0 0.0
    %1244 = vmatpush.msra.mxu0 0.0
    %1245 = vmatpush.msra.mxu0 0.0
    %1246 = vmatpush.msra.mxu0 %v825
    %1247 = vmatpush.msra.mxu0 %v824
    %1248 = vmatpush.msra.mxu0 %v823
    %1249 = vmatpush.msra.mxu0 %v822
    %1250 = vmatmul.f32.gmra.mxu0 %v1232
    %v1251 = vpop.f32.mrf.mxu0
    %v1252 = vadd.f32 0.0, %v1251
    %1253 = vdwg.mxu0
    %v1254 = vadd.f32 %v1231, %v1252
    %v1255 = vxor.u32 %v1254, 2147483648
    %v1256 = vmul.f32 %v1255, 1.442695
    %v1257 = vpow.pop %v1256
    %v1258 = vadd.f32 %v1257, 1.0
    %v1259 = vrcp.pop %v1258
    %v1260 = vmul.f32 %v1258, %v1259
    %v1261 = vsub.f32 1.0, %v1260
    %v1262 = vmul.f32 %v1259, %v1261
    %v1263 = vadd.f32 %v1259, %v1262
    %vm1264 = vweird.f32 %v1258
    %vm1265 = vweird.f32 %v1259
    %vm1266 = vmor %vm1264, %vm1265
    %v1267 = vsel %vm1266, %v1259, %v1263
    %v1268 = vand.u32 2147483647, %v1258
    %vm1269 = vcmp.eq.f32.partialorder %v1268, 8.507059e+37
    %v1270 = vand.u32 %v1258, 2147483648
    %v1271 = vor.u32 1.1754944e-38, %v1270
    %v1272 = vsel %vm1269, %v1271, %v1267
    %v1273 = vmul.f32 1.0, %v1272
    %v1274 = vtanh.pop %v1254
    %v1275 = vmul.f32 %v1273, %v1219
    %1277 = vrot.lane.b32.xlu0 %v1274, 64
    %v1278 = vpop.permute.xlu0 %1277
    %v1280 = vmul.f32 %v1273, %v1278
    %1282 = vrot.lane.b32.xlu0 %v1280, 32
    %v1283 = vpop.permute.xlu0 %1282
    %v1285 = vadd.f32 %v1275, %v1283
    %v1286 = vtanh.pop %v1285
    %1288 = vrot.lane.b32.xlu0 %v1286, 64
    %v1289 = vpop.permute.xlu0 %1288
    %v1291 = vmul.f32 %v1273, %v1289
    %1293 = vrot.lane.b32.xlu0 %v1291, 32
    %v1294 = vpop.permute.xlu0 %1293
    %1296 = vst.msk [vmem:[%s654] sm:$0xff] %vm97, %v1294
    %v1297 = vld [vmem:[%s656] sm:$0xff]
    %v1298 = vsel %vm97, %v1294, 0
    %1300 = vmatpush.msra.mxu0 0.0
    %1301 = vmatpush.msra.mxu0 0.0
    %1302 = vmatpush.msra.mxu0 0.0
    %1303 = vmatpush.msra.mxu0 0.0
    %1304 = vmatpush.msra.mxu0 0.0
    %1305 = vmatpush.msra.mxu0 0.0
    %1306 = vmatpush.msra.mxu0 0.0
    %1307 = vmatpush.msra.mxu0 0.0
    %1308 = vmatpush.msra.mxu0 0.0
    %1309 = vmatpush.msra.mxu0 0.0
    %1310 = vmatpush.msra.mxu0 0.0
    %1311 = vmatpush.msra.mxu0 0.0
    %1312 = vmatpush.msra.mxu0 %v825
    %1313 = vmatpush.msra.mxu0 %v824
    %1314 = vmatpush.msra.mxu0 %v823
    %1315 = vmatpush.msra.mxu0 %v822
    %1316 = vmatmul.f32.gmra.mxu0 %v1298
    %v1317 = vpop.f32.mrf.mxu0
    %v1318 = vadd.f32 0.0, %v1317
    %1319 = vdwg.mxu0
    %v1320 = vadd.f32 %v1297, %v1318
    %v1321 = vxor.u32 %v1320, 2147483648
    %v1322 = vmul.f32 %v1321, 1.442695
    %v1323 = vpow.pop %v1322
    %v1324 = vadd.f32 %v1323, 1.0
    %v1325 = vrcp.pop %v1324
    %v1326 = vmul.f32 %v1324, %v1325
    %v1327 = vsub.f32 1.0, %v1326
    %v1328 = vmul.f32 %v1325, %v1327
    %v1329 = vadd.f32 %v1325, %v1328
    %vm1330 = vweird.f32 %v1324
    %vm1331 = vweird.f32 %v1325
    %vm1332 = vmor %vm1330, %vm1331
    %v1333 = vsel %vm1332, %v1325, %v1329
    %v1334 = vand.u32 2147483647, %v1324
    %vm1335 = vcmp.eq.f32.partialorder %v1334, 8.507059e+37
    %v1336 = vand.u32 %v1324, 2147483648
    %v1337 = vor.u32 1.1754944e-38, %v1336
    %v1338 = vsel %vm1335, %v1337, %v1333
    %v1339 = vmul.f32 1.0, %v1338
    %v1340 = vtanh.pop %v1320
    %v1341 = vmul.f32 %v1339, %v1285
    %1343 = vrot.lane.b32.xlu0 %v1340, 64
    %v1344 = vpop.permute.xlu0 %1343
    %v1346 = vmul.f32 %v1339, %v1344
    %1348 = vrot.lane.b32.xlu0 %v1346, 32
    %v1349 = vpop.permute.xlu0 %1348
    %v1351 = vadd.f32 %v1341, %v1349
    %v1352 = vtanh.pop %v1351
    %1354 = vrot.lane.b32.xlu0 %v1352, 64
    %v1355 = vpop.permute.xlu0 %1354
    %v1357 = vmul.f32 %v1339, %v1355
    %1359 = vrot.lane.b32.xlu0 %v1357, 32
    %v1360 = vpop.permute.xlu0 %1359
    %1362 = vst.msk [vmem:[%s722] sm:$0xff] %vm97, %v1360
    %s1363 = scalar_lea.vmem [#allocation11], 8
    %1364 = vst.msk [vmem:[%s1363] sm:$0xff] %vm97, %v1360
    %1366 = vrot.lane.b32.xlu0 %v1351, 96
    %v1367 = vpop.permute.xlu0 %1366
    %s1369 = scalar_lea.vmem [#allocation13], 8
    %1370 = vst.msk [vmem:[%s1369] sm:$0xff] %vm97, %v1367
    %v1371 = vld [vmem:[#allocation3] sm:$0xff]
    %v1372 = vld [vmem:[#allocation3 + $0x8] sm:$0xff]
    %v1373 = vld [vmem:[#allocation3 + $0x10] sm:$0xff]
    %v1374 = vld [vmem:[#allocation3 + $0x18] sm:$0xff]
    %v1375 = vld [vmem:[#allocation3 + $0x20] sm:$0xff]
    %v1376 = vld [vmem:[#allocation3 + $0x28] sm:$0xff]
    %v1377 = vld [vmem:[#allocation3 + $0x30] sm:$0xff]
    %v1378 = vld [vmem:[#allocation3 + $0x38] sm:$0xff]
    %v1379 = vld [vmem:[%s6] sm:$0xff]
    %v1380 = vld [vmem:[%s6 + $0x8] sm:$0xff]
    %v1381 = vld [vmem:[%s6 + $0x10] sm:$0xff]
    %v1382 = vld [vmem:[%s6 + $0x18] sm:$0xff]
    %v1383 = vld [vmem:[%s7] sm:$0x1]
    %v1385 = vperm.slane %v1383, 0
    %v1388 = vsel %vm97, %v1371, 0
    %v1391 = vsel %vm97, %v1372, 0
    %v1394 = vsel %vm97, %v1373, 0
    %v1397 = vsel %vm97, %v1374, 0
    %v1400 = vsel %vm97, %v1375, 0
    %v1403 = vsel %vm97, %v1376, 0
    %v1406 = vsel %vm97, %v1377, 0
    %v1409 = vsel %vm97, %v1378, 0
    %1411 = vmatpush.msra.mxu0 0.0
    %1412 = vmatpush.msra.mxu0 0.0
    %1413 = vmatpush.msra.mxu0 0.0
    %1414 = vmatpush.msra.mxu0 0.0
    %1415 = vmatpush.msra.mxu0 0.0
    %1416 = vmatpush.msra.mxu0 0.0
    %1417 = vmatpush.msra.mxu0 0.0
    %1418 = vmatpush.msra.mxu0 0.0
    %1419 = vmatpush.msra.mxu0 0.0
    %1420 = vmatpush.msra.mxu0 0.0
    %1421 = vmatpush.msra.mxu0 0.0
    %1422 = vmatpush.msra.mxu0 0.0
    %1423 = vmatpush.msra.mxu0 %v1382
    %1424 = vmatpush.msra.mxu0 %v1381
    %1425 = vmatpush.msra.mxu0 %v1380
    %1426 = vmatpush.msra.mxu0 %v1379
    %1427 = vmatmul.f32.gmra.mxu0 %v1388
    %v1428 = vpop.f32.mrf.mxu0
    %v1429 = vadd.f32 %v1385, %v1428
    %1430 = vmatmul.f32.gmra.mxu0 %v1391
    %v1431 = vpop.f32.mrf.mxu0
    %v1432 = vadd.f32 %v1385, %v1431
    %1433 = vmatmul.f32.gmra.mxu0 %v1394
    %v1434 = vpop.f32.mrf.mxu0
    %v1435 = vadd.f32 %v1385, %v1434
    %1436 = vmatmul.f32.gmra.mxu0 %v1397
    %v1437 = vpop.f32.mrf.mxu0
    %v1438 = vadd.f32 %v1385, %v1437
    %1439 = vmatmul.f32.gmra.mxu0 %v1400
    %v1440 = vpop.f32.mrf.mxu0
    %v1441 = vadd.f32 %v1385, %v1440
    %1442 = vmatmul.f32.gmra.mxu0 %v1403
    %v1443 = vpop.f32.mrf.mxu0
    %v1444 = vadd.f32 %v1385, %v1443
    %1445 = vmatmul.f32.gmra.mxu0 %v1406
    %v1446 = vpop.f32.mrf.mxu0
    %v1447 = vadd.f32 %v1385, %v1446
    %1448 = vmatmul.f32.gmra.mxu0 %v1409
    %v1449 = vpop.f32.mrf.mxu0
    %v1450 = vadd.f32 %v1385, %v1449
    %1451 = vdwg.mxu0
    %1452 = vst [vmem:[#allocation10] sm:$0xff] %v1429
    %1453 = vst [vmem:[#allocation10 + $0x8] sm:$0xff] %v1432
    %1454 = vst [vmem:[#allocation10 + $0x10] sm:$0xff] %v1435
    %1455 = vst [vmem:[#allocation10 + $0x18] sm:$0xff] %v1438
    %1456 = vst [vmem:[#allocation10 + $0x20] sm:$0xff] %v1441
    %1457 = vst [vmem:[#allocation10 + $0x28] sm:$0xff] %v1444
    %1458 = vst [vmem:[#allocation10 + $0x30] sm:$0xff] %v1447
    %1459 = vst [vmem:[#allocation10 + $0x38] sm:$0xff] %v1450
    // Predicated region
    $region46: #{tpu_custom_call.1} parent=1 // pred_check
      _
    $region47: #{tpu_custom_call.1} parent=1 // pred_check_branch
      %1461 = sbr.rel (0) target = $region49
    $region48: #{tpu_custom_call.1} parent=1 // pred_region
      %1463 = vsyncadd [#allocation6], 0
      %s1464 = sshll.u32 [#allocation10], 4
      %s1465 = int_to_ptr.vmem [resolvable:$true] %s1464
      %s1466 = sshll.u32 %s8, 4
      %s1467 = int_to_ptr.hbm [resolvable:$true] %s1466
      %1472 = dma.vmem_to_hbm [thread:$0]  %s1465, 1024, %s1467, [#allocation6], 128, 128, 8
    $region49: #{tpu_custom_call.1} parent=1 // pred_fallthru
      _
    // Predicated region
    $region50: #{tpu_custom_call.1} parent=1 // pred_check
      _
    $region51: #{tpu_custom_call.1} parent=1 // pred_check_branch
      %1474 = sbr.rel (0) target = $region53
    $region52: #{tpu_custom_call.1} parent=1 // pred_region
      %1476 = vsyncadd [#allocation12], 0
      %s1477 = sshll.u32 [#allocation11], 4
      %s1478 = int_to_ptr.vmem [resolvable:$true] %s1477
      %s1479 = sshll.u32 %s9, 4
      %s1480 = int_to_ptr.hbm [resolvable:$true] %s1479
      %1485 = dma.vmem_to_hbm [thread:$0]  %s1478, 256, %s1480, [#allocation12], 128, 128, 8
    $region53: #{tpu_custom_call.1} parent=1 // pred_fallthru
      _
    // Predicated region
    $region54: #{tpu_custom_call.1} parent=1 // pred_check
      _
    $region55: #{tpu_custom_call.1} parent=1 // pred_check_branch
      %1487 = sbr.rel (0) target = $region57
    $region56: #{tpu_custom_call.1} parent=1 // pred_region
      %1489 = vsyncadd [#allocation12], 0
      %s1490 = sshll.u32 [#allocation13], 4
      %s1491 = int_to_ptr.vmem [resolvable:$true] %s1490
      %s1492 = sshll.u32 %s10, 4
      %s1493 = int_to_ptr.hbm [resolvable:$true] %s1492
      %1498 = dma.vmem_to_hbm [thread:$0]  %s1491, 256, %s1493, [#allocation12], 128, 128, 8
    $region57: #{tpu_custom_call.1} parent=1 // pred_fallthru
      _
    // Predicated region
    $region58: #{tpu_custom_call.1} parent=1 // pred_check
      _
    $region59: #{tpu_custom_call.1} parent=1 // pred_check_branch
      %1500 = sbr.rel (0) target = $region61
    $region60: #{tpu_custom_call.1} parent=1 // pred_region
      %1502 = dma.done [#allocation6], 1024
    $region61: #{tpu_custom_call.1} parent=1 // pred_fallthru
      _
    // Predicated region
    $region62: #{tpu_custom_call.1} parent=1 // pred_check
      _
    $region63: #{tpu_custom_call.1} parent=1 // pred_check_branch
      %1504 = sbr.rel (0) target = $region65
    $region64: #{tpu_custom_call.1} parent=1 // pred_region
      %1506 = dma.done [#allocation12], 256
    $region65: #{tpu_custom_call.1} parent=1 // pred_fallthru
      _
    // Predicated region
    $region66: #{tpu_custom_call.1} parent=1 // pred_check
      _
    $region67: #{tpu_custom_call.1} parent=1 // pred_check_branch
      %1508 = sbr.rel (0) target = $region69
    $region68: #{tpu_custom_call.1} parent=1 // pred_region
      %1510 = dma.done [#allocation12], 256
    $region69: #{tpu_custom_call.1} parent=1 // pred_fallthru
      _
    %1511 = vsyncpa [#allocation5], 1
    %1512 = vsyncpa [#allocation8], 1
    %1513 = vsyncpa [#allocation6], 1
    %1514 = vsyncpa [#allocation12], 1

</llo_original>
